<compile_context>
chip_gen: v7x
topology: tpu7x:2x2x1
jax: 0.10.0
libtpu: 0.0.40
codegen_flags: <defaults>
</compile_context>

<pallas_src>
import functools

import jax
import jax.numpy as jnp
from jax.experimental import pallas as pl
from jax.experimental.pallas import tpu as pltpu

_LANE = 128          # lane width: padding target for hidden/class dims
_NEG_BIG = -1e30     # bias for padded class columns -> softmax prob exactly 0


def _round_up(n: int, m: int) -> int:
    return ((n + m - 1) // m) * m


# ---------------------------------------------------------------------------
# Kernel bodies
# ---------------------------------------------------------------------------
def _mlp_forward(x_ref, w1_ref, b1_ref, w2_ref, b2_ref):
    """bf16 matmuls (f32 accumulation) -> ReLU -> logits -> softmax -> argmax."""
    # Hidden layer: MXU matmul (bf16 in, f32 accumulate) + bias + ReLU (VPU).
    h = jnp.dot(x_ref[...], w1_ref[...],
                preferred_element_type=jnp.float32) + b1_ref[...]
    h = jnp.maximum(h, 0.0)
    # Output layer.  Padded class columns carry a -1e30 bias, so they drop
    # out of softmax / argmax / cross-entropy with no in-kernel masking.
    logits = jnp.dot(h.astype(jnp.bfloat16), w2_ref[...],
                     preferred_element_type=jnp.float32) + b2_ref[...]
    c_pad = logits.shape[1]

    m = jnp.max(logits, axis=1, keepdims=True)
    e = jnp.exp(logits - m)
    s = jnp.sum(e, axis=1, keepdims=True)
    # Divide on the otherwise-idle EUP slot; per-row scalar factor, so it
    # cannot change the per-row argmax.
    probs = e * pl.reciprocal(s, approx=True)

    # argmax(logits) == first column index attaining the row max (same as
    # torch.argmax / jnp.argmax first-occurrence semantics).  Done with
    # max / compare / min reductions only (always lowerable on Mosaic).
    col = jax.lax.broadcasted_iota(jnp.int32, logits.shape, 1)
    pred = jnp.min(
        jnp.where(logits == m, col.astype(jnp.float32), jnp.float32(c_pad)),
        axis=1, keepdims=True).astype(jnp.int32)
    return logits, m, s, probs, pred


def _train_kernel(x_ref, y_ref, w1_ref, b1_ref, w2_ref, b2_ref,
                  pred_p_ref, pred_ref, nll_ref):
    logits, m, s, probs, pred = _mlp_forward(x_ref, w1_ref, b1_ref, w2_ref, b2_ref)
    pred_p_ref[...] = probs.astype(pred_p_ref.dtype)   # bf16 writeback
    pred_ref[...] = pred

    # Per-row cross-entropy (full f32 path via exact log(s)); the mean over
    # the B valid rows is done in the wrapper, so there is no cross-iteration
    # state and the batch axis stays megacore-parallel.
    log_s = jnp.log(s)
    col = jax.lax.broadcasted_iota(jnp.int32, logits.shape, 1)
    y = y_ref[...]                                               # (tb, 1) int32
    log_p_y = jnp.sum(jnp.where(col == y, (logits - m) - log_s, 0.0),
                      axis=1, keepdims=True)                     # (tb, 1)
    nll_ref[...] = -log_p_y


def _eval_kernel(x_ref, w1_ref, b1_ref, w2_ref, b2_ref, pred_p_ref, pred_ref):
    _, _, _, probs, pred = _mlp_forward(x_ref, w1_ref, b1_ref, w2_ref, b2_ref)
    pred_p_ref[...] = probs.astype(pred_p_ref.dtype)
    pred_ref[...] = pred


# ---------------------------------------------------------------------------
# pallas_call wrappers
# ---------------------------------------------------------------------------
@functools.partial(jax.jit, static_argnames=("block_batch",))
def _forward_train(x_p, y_p, w1, b1, w2, b2, *, block_batch):
    b_pad, in_dim = x_p.shape
    hid_pad = w1.shape[1]
    c_pad = w2.shape[1]
    tb = block_batch
    n_blocks = b_pad // tb

    grid_spec = pltpu.PrefetchScalarGridSpec(
        num_scalar_prefetch=0,
        grid=(n_blocks,),
        in_specs=[
            # x: feature dim left un-padded (block last dim == full array dim).
            # TODO(synk): on v5e, if profiling shows exposed DMA on this stream,
            # add pipeline_mode=pl.Buffered(3).
            pl.BlockSpec((tb, in_dim), lambda i: (i, 0)),
            pl.BlockSpec((tb, 1), lambda i: (i, 0)),              # labels
            pl.BlockSpec((in_dim, hid_pad), lambda i: (0, 0)),    # w1 (resident)
            pl.BlockSpec((1, hid_pad), lambda i: (0, 0)),         # b1 (resident)
            pl.BlockSpec((hid_pad, c_pad), lambda i: (0, 0)),     # w2 (resident)
            pl.BlockSpec((1, c_pad), lambda i: (0, 0)),           # b2 (resident)
        ],
        out_specs=(
            pl.BlockSpec((tb, c_pad), lambda i: (i, 0)),          # pred_p (bf16)
            pl.BlockSpec((tb, 1), lambda i: (i, 0)),              # argmax
            pl.BlockSpec((tb, 1), lambda i: (i, 0)),              # per-row nll
        ),
    )
    return pl.pallas_call(
        _train_kernel,
        out_shape=(
            jax.ShapeDtypeStruct((b_pad, c_pad), jnp.bfloat16),
            jax.ShapeDtypeStruct((b_pad, 1), jnp.int32),
            jax.ShapeDtypeStruct((b_pad, 1), jnp.float32),
        ),
        grid_spec=grid_spec,
        compiler_params=pltpu.CompilerParams(
            # No cross-iteration state -> batch axis shards across TensorCores
            # on v7x; neutral on single-TC v5e/v6e.
            dimension_semantics=("parallel",),
            vmem_limit_bytes=32 * 1024 * 1024,
        ),
    )(x_p, y_p, w1, b1, w2, b2)


@functools.partial(jax.jit, static_argnames=("block_batch",))
def _forward_eval(x_p, w1, b1, w2, b2, *, block_batch):
    b_pad, in_dim = x_p.shape
    hid_pad = w1.shape[1]
    c_pad = w2.shape[1]
    tb = block_batch
    n_blocks = b_pad // tb

    grid_spec = pltpu.PrefetchScalarGridSpec(
        num_scalar_prefetch=0,
        grid=(n_blocks,),
        in_specs=[
            pl.BlockSpec((tb, in_dim), lambda i: (i, 0)),
            pl.BlockSpec((in_dim, hid_pad), lambda i: (0, 0)),
            pl.BlockSpec((1, hid_pad), lambda i: (0, 0)),
            pl.BlockSpec((hid_pad, c_pad), lambda i: (0, 0)),
            pl.BlockSpec((1, c_pad), lambda i: (0, 0)),
        ],
        out_specs=(
            pl.BlockSpec((tb, c_pad), lambda i: (i, 0)),
            pl.BlockSpec((tb, 1), lambda i: (i, 0)),
        ),
    )
    return pl.pallas_call(
        _eval_kernel,
        out_shape=(
            jax.ShapeDtypeStruct((b_pad, c_pad), jnp.bfloat16),
            jax.ShapeDtypeStruct((b_pad, 1), jnp.int32),
        ),
        grid_spec=grid_spec,
        compiler_params=pltpu.CompilerParams(
            dimension_semantics=("parallel",),
            vmem_limit_bytes=32 * 1024 * 1024,
        ),
    )(x_p, w1, b1, w2, b2)


# ---------------------------------------------------------------------------
# Parameters + public forward (mirrors CLDCClassifier.forward)
# ---------------------------------------------------------------------------
def init_params(key, in_dim, hidden_dim, num_classes):
    """nn.Linear-style U(-1/sqrt(fan_in), 1/sqrt(fan_in)) init.  Hidden/class
    dims are padded to 128 lanes; the feature (K) dim of w1 is left un-padded
    (the MXU handles small K internally).  Matmul weights are bfloat16,
    biases float32."""
    k1, k2, k3, k4 = jax.random.split(key, 4)
    lim1 = 1.0 / float(in_dim) ** 0.5
    lim2 = 1.0 / float(hidden_dim) ** 0.5
    w1 = jax.random.uniform(k1, (in_dim, hidden_dim), jnp.float32, -lim1, lim1)
    b1 = jax.random.uniform(k2, (hidden_dim,), jnp.float32, -lim1, lim1)
    w2 = jax.random.uniform(k3, (hidden_dim, num_classes), jnp.float32, -lim2, lim2)
    b2 = jax.random.uniform(k4, (num_classes,), jnp.float32, -lim2, lim2)

    hid_pad = _round_up(hidden_dim, _LANE)
    c_pad = _round_up(num_classes, _LANE)

    w1_p = jnp.zeros((in_dim, hid_pad), jnp.float32).at[:, :hidden_dim].set(w1)
    b1_p = jnp.zeros((1, hid_pad), jnp.float32).at[0, :hidden_dim].set(b1)
    w2_p = jnp.zeros((hid_pad, c_pad), jnp.float32).at[:hidden_dim, :num_classes].set(w2)
    # Padded class columns get a huge negative bias -> zero probability.
    b2_p = jnp.full((1, c_pad), _NEG_BIG, jnp.float32).at[0, :num_classes].set(b2)

    return {
        "w1": w1_p.astype(jnp.bfloat16), "b1": b1_p,
        "w2": w2_p.astype(jnp.bfloat16), "b2": b2_p,
        "in_dim": in_dim, "hidden_dim": hidden_dim, "num_classes": num_classes,
    }


def cldc_forward(params, x, y, training, block_batch=1024):
    """Mirrors CLDCClassifier.forward -> (cldc_loss, pred_p, pred)."""
    # TODO(synk): the vis=True path (stashing last-hidden activations / labels
    # on the module) has no kernel-side equivalent and is not implemented.
    B, _ = x.shape
    C = params["num_classes"]

    # Bucket the batch to 128-row tiles (single grid step for B <= block_batch)
    # so distinct batch sizes reuse compiled kernels.
    tb = _round_up(min(block_batch, _round_up(B, _LANE)), 8)
    b_pad = _round_up(B, tb)

    # Single fused pad on the batch dim only (no feature-dim pad, no 2nd copy).
    x_p = jnp.pad(x.astype(jnp.bfloat16), ((0, b_pad - B), (0, 0)))

    if training and y is not None:
        y_p = jnp.pad(y.astype(jnp.int32), (0, b_pad - B)).reshape(b_pad, 1)
        pred_p_pad, pred_pad, nll_pad = _forward_train(
            x_p, y_p, params["w1"], params["b1"], params["w2"], params["b2"],
            block_batch=tb)
        # Mean CE over the B valid rows (padding rows sliced off here, so the
        # kernel needs no num_valid scalar and stays batch-parallel).
        cldc_loss = jnp.sum(nll_pad[:B, 0]) / jnp.float32(B)
    else:
        pred_p_pad, pred_pad = _forward_eval(
            x_p, params["w1"], params["b1"], params["w2"], params["b2"],
            block_batch=tb)
        cldc_loss = None

    pred_p = pred_p_pad[:B, :C].astype(jnp.float32)
    pred = pred_pad[:B, 0]
    return cldc_loss, pred_p, pred


if __name__ == "__main__":
    B, IN_DIM, HIDDEN, NUM_CLASSES = 200, 32, 64, 10

    key = jax.random.PRNGKey(0)
    kx, ky, kp = jax.random.split(key, 3)
    x = jax.random.normal(kx, (B, IN_DIM), jnp.float32)
    y = jax.random.randint(ky, (B,), 0, NUM_CLASSES, jnp.int32)
    params = init_params(kp, IN_DIM, HIDDEN, NUM_CLASSES)

    # Training path, multi-block: block_batch=128 -> 2 parallel grid tiles.
    loss, pred_p, pred = cldc_forward(params, x, y, training=True, block_batch=128)
    jax.block_until_ready((loss, pred_p, pred))

    # Training path, default block_batch collapses B=200 into a single tile.
    loss1, pred_p1, pred1 = cldc_forward(params, x, y, training=True)
    jax.block_until_ready((loss1, pred_p1, pred1))

    # Inference path: no labels, no loss compute.
    loss_eval, pred_p_eval, pred_eval = cldc_forward(
        params, x, None, training=False, block_batch=128)
    jax.block_until_ready((pred_p_eval, pred_eval))
    assert loss_eval is None

    # Pure-JAX reference using the identical bf16 matmul math.
    w1, b1, w2, b2 = params["w1"], params["b1"], params["w2"], params["b2"]
    x_bf = x.astype(jnp.bfloat16)
    h_ref = jnp.maximum(
        jnp.dot(x_bf, w1, preferred_element_type=jnp.float32) + b1, 0.0)
    logits_ref = (jnp.dot(h_ref.astype(jnp.bfloat16), w2,
                          preferred_element_type=jnp.float32) + b2)[:, :NUM_CLASSES]
    p_ref = jax.nn.softmax(logits_ref, axis=1)
    loss_expected = -jnp.mean(jnp.take_along_axis(
        jax.nn.log_softmax(logits_ref, axis=1), y[:, None], axis=1))
    pred_expected = jnp.argmax(logits_ref, axis=1)

    assert pred_p.shape == (B, NUM_CLASSES)
    # pred_p is stored as bf16 with an approximate-reciprocal softmax divide.
    assert jnp.allclose(pred_p, p_ref, atol=1e-2), "softmax mismatch (train, 2 blocks)"
    assert jnp.allclose(pred_p1, p_ref, atol=1e-2), "softmax mismatch (train, 1 block)"
    assert jnp.allclose(pred_p_eval, p_ref, atol=1e-2), "softmax mismatch (eval)"
    # Loss path is full f32 (exact log / f32-accumulated matmul).
    assert jnp.allclose(loss, loss_expected, atol=2e-4), "cross-entropy loss mismatch"
    assert jnp.allclose(loss1, loss_expected, atol=2e-4), "cross-entropy loss mismatch (1 block)"
    # In-kernel argmax is exact on the f32 logits.
    assert jnp.array_equal(pred, pred_expected), "argmax mismatch (train)"
    assert jnp.array_equal(pred1, pred_expected), "argmax mismatch (train, 1 block)"
    assert jnp.array_equal(pred_eval, pred_expected), "argmax mismatch (eval)"

    print("KERNEL_OK")
</pallas_src>

<mosaic_0001>
module attributes {stable_mosaic.version = 11 : i64} {
  func.func @_train_kernel(%arg0: i32, %arg1: memref<128x32xbf16, #tpu.memory_space<vmem>>, %arg2: memref<128x1xi32, #tpu.memory_space<vmem>>, %arg3: memref<32x128xbf16, #tpu.memory_space<vmem>>, %arg4: memref<1x128xf32, #tpu.memory_space<vmem>>, %arg5: memref<128x128xbf16, #tpu.memory_space<vmem>>, %arg6: memref<1x128xf32, #tpu.memory_space<vmem>>, %arg7: memref<128x128xbf16, #tpu.memory_space<vmem>>, %arg8: memref<128x1xi32, #tpu.memory_space<vmem>>, %arg9: memref<128x1xf32, #tpu.memory_space<vmem>>) attributes {dimension_semantics = [#tpu.dimension_semantics<parallel>], iteration_bounds = array<i64: 2>, scalar_prefetch = 0 : i64, scratch_operands = 0 : i64, tpu.core_type = #tpu.core_type<tc>, window_params = [{transform_indices = @transform_0, window_bounds = array<i64: 128, 32>}, {transform_indices = @transform_1, window_bounds = array<i64: 128, 1>}, {pipeline_mode = #tpu.pipeline_mode<synchronous>, transform_indices = @transform_2, window_bounds = array<i64: 32, 128>}, {pipeline_mode = #tpu.pipeline_mode<synchronous>, transform_indices = @transform_3, window_bounds = array<i64: 1, 128>}, {pipeline_mode = #tpu.pipeline_mode<synchronous>, transform_indices = @transform_4, window_bounds = array<i64: 128, 128>}, {pipeline_mode = #tpu.pipeline_mode<synchronous>, transform_indices = @transform_5, window_bounds = array<i64: 1, 128>}, {transform_indices = @transform_6, window_bounds = array<i64: 128, 128>}, {transform_indices = @transform_7, window_bounds = array<i64: 128, 1>}, {transform_indices = @transform_8, window_bounds = array<i64: 128, 1>}]} {
    %c0 = arith.constant 0 : index
    %c0_0 = arith.constant 0 : index
    %0 = vector.load %arg1[%c0, %c0_0] : memref<128x32xbf16, #tpu.memory_space<vmem>>, vector<128x32xbf16>
    %c0_1 = arith.constant 0 : index
    %c0_2 = arith.constant 0 : index
    %1 = vector.load %arg3[%c0_1, %c0_2] : memref<32x128xbf16, #tpu.memory_space<vmem>>, vector<32x128xbf16>
    %cst = arith.constant dense<0.000000e+00> : vector<128x128xf32>
    %2 = tpu.matmul %0, %1, %cst {dimension_numbers = #tpu.dot_dimension_numbers<[1], [0], [0], [1], [0, 0, 1, 1], [], []>} : vector<128x32xbf16>, vector<32x128xbf16>, vector<128x128xf32> -> vector<128x128xf32>
    %c0_3 = arith.constant 0 : index
    %c0_4 = arith.constant 0 : index
    %3 = vector.load %arg4[%c0_3, %c0_4] : memref<1x128xf32, #tpu.memory_space<vmem>>, vector<1x128xf32>
    %4 = vector.broadcast %3 : vector<1x128xf32> to vector<128x128xf32>
    %5 = arith.addf %2, %4 : vector<128x128xf32>
    %cst_5 = arith.constant 0.000000e+00 : f32
    %6 = vector.broadcast %cst_5 : f32 to vector<128x128xf32>
    %7 = arith.maximumf %5, %6 : vector<128x128xf32>
    %8 = arith.truncf %7 : vector<128x128xf32> to vector<128x128xbf16>
    %c0_6 = arith.constant 0 : index
    %c0_7 = arith.constant 0 : index
    %9 = vector.load %arg5[%c0_6, %c0_7] : memref<128x128xbf16, #tpu.memory_space<vmem>>, vector<128x128xbf16>
    %cst_8 = arith.constant dense<0.000000e+00> : vector<128x128xf32>
    %10 = tpu.matmul %8, %9, %cst_8 {dimension_numbers = #tpu.dot_dimension_numbers<[1], [0], [0], [1], [0, 0, 1, 1], [], []>} : vector<128x128xbf16>, vector<128x128xbf16>, vector<128x128xf32> -> vector<128x128xf32>
    %c0_9 = arith.constant 0 : index
    %c0_10 = arith.constant 0 : index
    %11 = vector.load %arg6[%c0_9, %c0_10] : memref<1x128xf32, #tpu.memory_space<vmem>>, vector<1x128xf32>
    %12 = vector.broadcast %11 : vector<1x128xf32> to vector<128x128xf32>
    %13 = arith.addf %10, %12 : vector<128x128xf32>
    %cst_11 = arith.constant dense<0xFF800000> : vector<128xf32>
    %14 = vector.multi_reduction <maximumf>, %13, %cst_11 [1] : vector<128x128xf32> to vector<128xf32>
    %15 = vector.shape_cast %14 : vector<128xf32> to vector<128x1xf32>
    %16 = vector.broadcast %15 : vector<128x1xf32> to vector<128x128xf32>
    %17 = arith.subf %13, %16 : vector<128x128xf32>
    %18 = math.exp %17 : vector<128x128xf32>
    %cst_12 = arith.constant dense<0.000000e+00> : vector<128xf32>
    %19 = vector.multi_reduction <add>, %18, %cst_12 [1] : vector<128x128xf32> to vector<128xf32>
    %20 = vector.shape_cast %19 : vector<128xf32> to vector<128x1xf32>
    %21 = tpu.reciprocal %20 {approx = true} : vector<128x1xf32> -> vector<128x1xf32>
    %22 = vector.broadcast %21 : vector<128x1xf32> to vector<128x128xf32>
    %23 = arith.mulf %18, %22 : vector<128x128xf32>
    %24 = tpu.iota {dimensions = array<i32: 1>} : vector<128x128xi32>
    %25 = vector.broadcast %15 : vector<128x1xf32> to vector<128x128xf32>
    %26 = arith.cmpf oeq, %13, %25 : vector<128x128xf32>
    %27 = arith.sitofp %24 : vector<128x128xi32> to vector<128x128xf32>
    %cst_13 = arith.constant 1.280000e+02 : f32
    %28 = vector.broadcast %cst_13 : f32 to vector<128x128xf32>
    %29 = arith.select %26, %27, %28 : vector<128x128xi1>, vector<128x128xf32>
    %cst_14 = arith.constant dense<0x7F800000> : vector<128xf32>
    %30 = vector.multi_reduction <minimumf>, %29, %cst_14 [1] : vector<128x128xf32> to vector<128xf32>
    %31 = vector.shape_cast %30 : vector<128xf32> to vector<128x1xf32>
    %32 = arith.fptosi %31 : vector<128x1xf32> to vector<128x1xi32>
    %33 = arith.truncf %23 : vector<128x128xf32> to vector<128x128xbf16>
    %c0_15 = arith.constant 0 : index
    %c0_16 = arith.constant 0 : index
    %34 = vector.load %arg7[%c0_15, %c0_16] : memref<128x128xbf16, #tpu.memory_space<vmem>>, vector<128x128xbf16>
    tpu.vector_store %arg7[%c0_15, %c0_16], %33 {strides = array<i32>} : memref<128x128xbf16, #tpu.memory_space<vmem>>, vector<128x128xbf16>,
    %c0_17 = arith.constant 0 : index
    %c0_18 = arith.constant 0 : index
    %35 = vector.load %arg8[%c0_17, %c0_18] : memref<128x1xi32, #tpu.memory_space<vmem>>, vector<128x1xi32>
    tpu.vector_store %arg8[%c0_17, %c0_18], %32 {strides = array<i32>} : memref<128x1xi32, #tpu.memory_space<vmem>>, vector<128x1xi32>,
    %36 = math.log %20 : vector<128x1xf32>
    %37 = tpu.iota {dimensions = array<i32: 1>} : vector<128x128xi32>
    %c0_19 = arith.constant 0 : index
    %c0_20 = arith.constant 0 : index
    %38 = vector.load %arg2[%c0_19, %c0_20] : memref<128x1xi32, #tpu.memory_space<vmem>>, vector<128x1xi32>
    %39 = vector.broadcast %38 : vector<128x1xi32> to vector<128x128xi32>
    %40 = arith.cmpi eq, %37, %39 : vector<128x128xi32>
    %41 = vector.broadcast %15 : vector<128x1xf32> to vector<128x128xf32>
    %42 = arith.subf %13, %41 : vector<128x128xf32>
    %43 = vector.broadcast %36 : vector<128x1xf32> to vector<128x128xf32>
    %44 = arith.subf %42, %43 : vector<128x128xf32>
    %cst_21 = arith.constant 0.000000e+00 : f32
    %45 = vector.broadcast %cst_21 : f32 to vector<128x128xf32>
    %46 = arith.select %40, %44, %45 : vector<128x128xi1>, vector<128x128xf32>
    %cst_22 = arith.constant dense<0.000000e+00> : vector<128xf32>
    %47 = vector.multi_reduction <add>, %46, %cst_22 [1] : vector<128x128xf32> to vector<128xf32>
    %48 = vector.shape_cast %47 : vector<128xf32> to vector<128x1xf32>
    %cst_23 = arith.constant 0.000000e+00 : f32
    %49 = vector.broadcast %cst_23 : f32 to vector<128x1xf32>
    %50 = arith.subf %49, %48 : vector<128x1xf32>
    %c0_24 = arith.constant 0 : index
    %c0_25 = arith.constant 0 : index
    %51 = vector.load %arg9[%c0_24, %c0_25] : memref<128x1xf32, #tpu.memory_space<vmem>>, vector<128x1xf32>
    tpu.vector_store %arg9[%c0_24, %c0_25], %50 {strides = array<i32>} : memref<128x1xf32, #tpu.memory_space<vmem>>, vector<128x1xf32>,
    return
  }
  func.func @transform_0(%arg0: i32) -> (i32, i32) {
    %c0_i32 = arith.constant 0 : i32
    %c0_i32_0 = arith.constant 0 : i32
    return %arg0, %c0_i32 : i32, i32
  }
  func.func @transform_1(%arg0: i32) -> (i32, i32) {
    %c0_i32 = arith.constant 0 : i32
    %c0_i32_0 = arith.constant 0 : i32
    return %arg0, %c0_i32 : i32, i32
  }
  func.func @transform_2(%arg0: i32) -> (i32, i32) {
    %c0_i32 = arith.constant 0 : i32
    %c0_i32_0 = arith.constant 0 : i32
    %c0_i32_1 = arith.constant 0 : i32
    return %c0_i32, %c0_i32_0 : i32, i32
  }
  func.func @transform_3(%arg0: i32) -> (i32, i32) {
    %c0_i32 = arith.constant 0 : i32
    %c0_i32_0 = arith.constant 0 : i32
    %c0_i32_1 = arith.constant 0 : i32
    return %c0_i32, %c0_i32_0 : i32, i32
  }
  func.func @transform_4(%arg0: i32) -> (i32, i32) {
    %c0_i32 = arith.constant 0 : i32
    %c0_i32_0 = arith.constant 0 : i32
    %c0_i32_1 = arith.constant 0 : i32
    return %c0_i32, %c0_i32_0 : i32, i32
  }
  func.func @transform_5(%arg0: i32) -> (i32, i32) {
    %c0_i32 = arith.constant 0 : i32
    %c0_i32_0 = arith.constant 0 : i32
    %c0_i32_1 = arith.constant 0 : i32
    return %c0_i32, %c0_i32_0 : i32, i32
  }
  func.func @transform_6(%arg0: i32) -> (i32, i32) {
    %c0_i32 = arith.constant 0 : i32
    %c0_i32_0 = arith.constant 0 : i32
    return %arg0, %c0_i32 : i32, i32
  }
  func.func @transform_7(%arg0: i32) -> (i32, i32) {
    %c0_i32 = arith.constant 0 : i32
    %c0_i32_0 = arith.constant 0 : i32
    return %arg0, %c0_i32 : i32, i32
  }
  func.func @transform_8(%arg0: i32) -> (i32, i32) {
    %c0_i32 = arith.constant 0 : i32
    %c0_i32_0 = arith.constant 0 : i32
    return %arg0, %c0_i32 : i32, i32
  }
}

</mosaic_0001>

<llo_original>
// kernel: _forward_train.1
$region0: #{_forward_train.1}
  #allocation0 [shape = 'u32[]', space=smem, size = 0x4, offset = 0x4, fixed_abs, tag = 'smem constant byte address 0x4 - core index']
  #allocation1 [shape = 'u32[144,128]{1,0:T(1,128)}', space=vmem, size = 0x12000, scoped, tag = 'internal scratch']
  %s0 = inlined_call_operand.vmem [shape: bf16[256,32], index: 0, kind: input, shape index: {}]
  %s1 = inlined_call_operand.vmem [shape: s32[256,1], index: 1, kind: input, shape index: {}]
  %s2 = inlined_call_operand.vmem [shape: bf16[32,128], index: 2, kind: input, shape index: {}]
  %s3 = inlined_call_operand.vmem [shape: f32[1,128], index: 3, kind: input, shape index: {}]
  %s4 = inlined_call_operand.vmem [shape: bf16[128,128], index: 4, kind: input, shape index: {}]
  %s5 = inlined_call_operand.vmem [shape: f32[1,128], index: 5, kind: input, shape index: {}]
  %s6 = inlined_call_operand.hbm [shape: bf16[256,128], index: 6, kind: output, shape index: {0}]
  %s7 = inlined_call_operand.vmem [shape: s32[256,1], index: 7, kind: output, shape index: {1}]
  %s8 = inlined_call_operand.vmem [shape: f32[256,1], index: 8, kind: output, shape index: {2}]
  %9 = xla_tuple %s6, %s7, %s8
  %s10 = sld [smem:[#allocation0]]
  $region73: #{_forward_train.1} parent=0
    _
  %s12 = ssub.s32 1, %s10
  %s13 = scalar_select 0, %s12, %s10
  $region1: #{_forward_train.1} parent=0
    #allocation2 [shape = 'u8[65536]{0}', space=vmem, size = 0x10000, scoped, tag = 'output window, operand 0']
    #allocation3 [shape = 's32[2]{0}', space=sflag, size = 0x8, scoped, tag = 'scoped memory for _forward_train.1']
    %14 = vsyncpa [#allocation3], 0
    %s15 = scalar_lea.sflag [#allocation3], 1
    %16 = vsyncpa %s15, 0
    loop: start=0, step=1, limit=4
    $region2: #{_forward_train.1} parent=1 // loop_pre_header
      _
    $region3: #{_forward_train.1} parent=1 // loop_header
      %s18 = sphi 0, %s22
      %p19 = scmp.ge.s32.totalorder %s18, 4
      %s28 = sphi 0, %s30
      %s31 = sphi 0, %s28
      %s32 = sphi 0, %s31
      %s48 = sphi 0, %s32
      %s54 = sphi 0, %s56
      %s57 = sphi 0, %s54
      %s58 = sphi 0, %s57
      %s74 = sphi 0, %s58
      %s78 = sphi 0, %s78
      %s80 = sphi 0, %s78
      %s81 = sphi 0, %s80
      %s95 = sphi 0, %s81
      %s99 = sphi 0, %s99
      %s101 = sphi 0, %s99
      %s102 = sphi 0, %s101
      %s116 = sphi 0, %s102
      %s120 = sphi 0, %s120
      %s122 = sphi 0, %s120
      %s123 = sphi 0, %s122
      %s137 = sphi 0, %s123
      %s141 = sphi 0, %s141
      %s143 = sphi 0, %s141
      %s144 = sphi 0, %s143
      %s158 = sphi 0, %s144
      %s164 = sphi 0, %s166
      %s167 = sphi 0, %s164
      %s168 = sphi 0, %s167
      %s184 = sphi 0, %s168
      %s190 = sphi 0, %s192
      %s193 = sphi 0, %s190
      %s194 = sphi 0, %s193
      %s210 = sphi 0, %s194
      %s216 = sphi 0, %s218
      %s219 = sphi 0, %s216
      %s220 = sphi 0, %s219
      %s236 = sphi 0, %s220
    $region4: #{_forward_train.1} parent=1 // loop_header_branch
      %21 = sbr.rel (%p19) target = $region8
    $region5: #{_forward_train.1} parent=1 // loop_body
      %s23 = ssub.s32 %s18, 1
      %s24 = ssub.s32 %s18, 2
      %s25 = sadd.s32 %s18, 1
      %s26 = ssub.s32 %s18, %s25
      %p27 = scmp.eq.s32.totalorder %s26, 0
      %s29 = sadd.s32 %s28, 1
      %s30 = scalar_select %p27, %s28, %s29
      %p33 = pneg %p27
      %p34 = scmp.eq.s32.totalorder %s18, 1
      %p35 = por %p33, %p34
      %p36 = scmp.ne.s32.totalorder %s28, %s31
      %p37 = scmp.eq.s32.totalorder %s18, 0
      %p38 = por %p36, %p37
      %p39 = scmp.ne.s32.totalorder %s28, %s31
      %p40 = scmp.eq.s32.totalorder %s23, 1
      %p41 = por %p39, %p40
      %p42 = scmp.ne.s32.totalorder %s31, %s32
      %p43 = scmp.eq.s32.totalorder %s23, 0
      %p44 = por %p42, %p43
      %p45 = scmp.ne.s32.totalorder %s31, %s32
      %p46 = scmp.eq.s32.totalorder %s24, 1
      %p47 = por %p45, %p46
      %p49 = scmp.ne.s32.totalorder %s32, %s48
      %p50 = scmp.eq.s32.totalorder %s24, 0
      %p51 = por %p49, %p50
      %s52 = ssub.s32 %s18, %s25
      %p53 = scmp.eq.s32.totalorder %s52, 0
      %s55 = sadd.s32 %s54, 1
      %s56 = scalar_select %p53, %s54, %s55
      %p59 = pneg %p53
      %p60 = scmp.eq.s32.totalorder %s18, 1
      %p61 = por %p59, %p60
      %p62 = scmp.ne.s32.totalorder %s54, %s57
      %p63 = scmp.eq.s32.totalorder %s18, 0
      %p64 = por %p62, %p63
      %p65 = scmp.ne.s32.totalorder %s54, %s57
      %p66 = scmp.eq.s32.totalorder %s23, 1
      %p67 = por %p65, %p66
      %p68 = scmp.ne.s32.totalorder %s57, %s58
      %p69 = scmp.eq.s32.totalorder %s23, 0
      %p70 = por %p68, %p69
      %p71 = scmp.ne.s32.totalorder %s57, %s58
      %p72 = scmp.eq.s32.totalorder %s24, 1
      %p73 = por %p71, %p72
      %p75 = scmp.ne.s32.totalorder %s58, %s74
      %p76 = scmp.eq.s32.totalorder %s24, 0
      %p77 = por %p75, %p76
      %s79 = sadd.s32 %s78, 1
      %p82 = scmp.eq.s32.totalorder %s18, 1
      %p83 = scmp.ne.s32.totalorder %s78, %s80
      %p84 = scmp.eq.s32.totalorder %s18, 0
      %p85 = por %p83, %p84
      %p86 = scmp.ne.s32.totalorder %s78, %s80
      %p87 = scmp.eq.s32.totalorder %s23, 1
      %p88 = por %p86, %p87
      %p89 = scmp.ne.s32.totalorder %s80, %s81
      %p90 = scmp.eq.s32.totalorder %s23, 0
      %p91 = por %p89, %p90
      %p92 = scmp.ne.s32.totalorder %s80, %s81
      %p93 = scmp.eq.s32.totalorder %s24, 1
      %p94 = por %p92, %p93
      %p96 = scmp.ne.s32.totalorder %s81, %s95
      %p97 = scmp.eq.s32.totalorder %s24, 0
      %p98 = por %p96, %p97
      %s100 = sadd.s32 %s99, 1
      %p103 = scmp.eq.s32.totalorder %s18, 1
      %p104 = scmp.ne.s32.totalorder %s99, %s101
      %p105 = scmp.eq.s32.totalorder %s18, 0
      %p106 = por %p104, %p105
      %p107 = scmp.ne.s32.totalorder %s99, %s101
      %p108 = scmp.eq.s32.totalorder %s23, 1
      %p109 = por %p107, %p108
      %p110 = scmp.ne.s32.totalorder %s101, %s102
      %p111 = scmp.eq.s32.totalorder %s23, 0
      %p112 = por %p110, %p111
      %p113 = scmp.ne.s32.totalorder %s101, %s102
      %p114 = scmp.eq.s32.totalorder %s24, 1
      %p115 = por %p113, %p114
      %p117 = scmp.ne.s32.totalorder %s102, %s116
      %p118 = scmp.eq.s32.totalorder %s24, 0
      %p119 = por %p117, %p118
      %s121 = sadd.s32 %s120, 1
      %p124 = scmp.eq.s32.totalorder %s18, 1
      %p125 = scmp.ne.s32.totalorder %s120, %s122
      %p126 = scmp.eq.s32.totalorder %s18, 0
      %p127 = por %p125, %p126
      %p128 = scmp.ne.s32.totalorder %s120, %s122
      %p129 = scmp.eq.s32.totalorder %s23, 1
      %p130 = por %p128, %p129
      %p131 = scmp.ne.s32.totalorder %s122, %s123
      %p132 = scmp.eq.s32.totalorder %s23, 0
      %p133 = por %p131, %p132
      %p134 = scmp.ne.s32.totalorder %s122, %s123
      %p135 = scmp.eq.s32.totalorder %s24, 1
      %p136 = por %p134, %p135
      %p138 = scmp.ne.s32.totalorder %s123, %s137
      %p139 = scmp.eq.s32.totalorder %s24, 0
      %p140 = por %p138, %p139
      %s142 = sadd.s32 %s141, 1
      %p145 = scmp.eq.s32.totalorder %s18, 1
      %p146 = scmp.ne.s32.totalorder %s141, %s143
      %p147 = scmp.eq.s32.totalorder %s18, 0
      %p148 = por %p146, %p147
      %p149 = scmp.ne.s32.totalorder %s141, %s143
      %p150 = scmp.eq.s32.totalorder %s23, 1
      %p151 = por %p149, %p150
      %p152 = scmp.ne.s32.totalorder %s143, %s144
      %p153 = scmp.eq.s32.totalorder %s23, 0
      %p154 = por %p152, %p153
      %p155 = scmp.ne.s32.totalorder %s143, %s144
      %p156 = scmp.eq.s32.totalorder %s24, 1
      %p157 = por %p155, %p156
      %p159 = scmp.ne.s32.totalorder %s144, %s158
      %p160 = scmp.eq.s32.totalorder %s24, 0
      %p161 = por %p159, %p160
      %s162 = ssub.s32 %s18, %s25
      %p163 = scmp.eq.s32.totalorder %s162, 0
      %s165 = sadd.s32 %s164, 1
      %s166 = scalar_select %p163, %s164, %s165
      %p169 = pneg %p163
      %p170 = scmp.eq.s32.totalorder %s18, 1
      %p171 = por %p169, %p170
      %p172 = scmp.ne.s32.totalorder %s164, %s167
      %p173 = scmp.eq.s32.totalorder %s18, 0
      %p174 = por %p172, %p173
      %p175 = scmp.ne.s32.totalorder %s164, %s167
      %p176 = scmp.eq.s32.totalorder %s23, 1
      %p177 = por %p175, %p176
      %p178 = scmp.ne.s32.totalorder %s167, %s168
      %p179 = scmp.eq.s32.totalorder %s23, 0
      %p180 = por %p178, %p179
      %p181 = scmp.ne.s32.totalorder %s167, %s168
      %p182 = scmp.eq.s32.totalorder %s24, 1
      %p183 = por %p181, %p182
      %p185 = scmp.ne.s32.totalorder %s168, %s184
      %p186 = scmp.eq.s32.totalorder %s24, 0
      %p187 = por %p185, %p186
      %s188 = ssub.s32 %s18, %s25
      %p189 = scmp.eq.s32.totalorder %s188, 0
      %s191 = sadd.s32 %s190, 1
      %s192 = scalar_select %p189, %s190, %s191
      %p195 = pneg %p189
      %p196 = scmp.eq.s32.totalorder %s18, 1
      %p197 = por %p195, %p196
      %p198 = scmp.ne.s32.totalorder %s190, %s193
      %p199 = scmp.eq.s32.totalorder %s18, 0
      %p200 = por %p198, %p199
      %p201 = scmp.ne.s32.totalorder %s190, %s193
      %p202 = scmp.eq.s32.totalorder %s23, 1
      %p203 = por %p201, %p202
      %p204 = scmp.ne.s32.totalorder %s193, %s194
      %p205 = scmp.eq.s32.totalorder %s23, 0
      %p206 = por %p204, %p205
      %p207 = scmp.ne.s32.totalorder %s193, %s194
      %p208 = scmp.eq.s32.totalorder %s24, 1
      %p209 = por %p207, %p208
      %p211 = scmp.ne.s32.totalorder %s194, %s210
      %p212 = scmp.eq.s32.totalorder %s24, 0
      %p213 = por %p211, %p212
      %s214 = ssub.s32 %s18, %s25
      %p215 = scmp.eq.s32.totalorder %s214, 0
      %s217 = sadd.s32 %s216, 1
      %s218 = scalar_select %p215, %s216, %s217
      %p221 = pneg %p215
      %p222 = scmp.eq.s32.totalorder %s18, 1
      %p223 = por %p221, %p222
      %p224 = scmp.ne.s32.totalorder %s216, %s219
      %p225 = scmp.eq.s32.totalorder %s18, 0
      %p226 = por %p224, %p225
      %p227 = scmp.ne.s32.totalorder %s216, %s219
      %p228 = scmp.eq.s32.totalorder %s23, 1
      %p229 = por %p227, %p228
      %p230 = scmp.ne.s32.totalorder %s219, %s220
      %p231 = scmp.eq.s32.totalorder %s23, 0
      %p232 = por %p230, %p231
      %p233 = scmp.ne.s32.totalorder %s219, %s220
      %p234 = scmp.eq.s32.totalorder %s24, 1
      %p235 = por %p233, %p234
      %p237 = scmp.ne.s32.totalorder %s220, %s236
      %p238 = scmp.eq.s32.totalorder %s24, 0
      %p239 = por %p237, %p238
      %p240 = scmp.le.s32.totalorder 1, %s18
      %p241 = scmp.lt.s32.totalorder %s18, 3
      %p242 = pnand %p240, %p241
      %p243 = pneg %p242
      // Predicated region
      $region9: #{_forward_train.1} parent=5 // pred_check
        _
      $region10: #{_forward_train.1} parent=5 // pred_check_branch
        %245 = sbr.rel (%p242) target = $region12
      $region11: #{_forward_train.1} parent=5 // pred_region
        %s246 = ssub.s32 %s18, 1
        // Predicated region
        $region13: #{_forward_train.1} parent=11 // pred_check
          %p247 = pneg %p91
        $region14: #{_forward_train.1} parent=11 // pred_check_branch
          %249 = sbr.rel (%p247) target = $region16
        $region15: #{_forward_train.1} parent=11 // pred_region
          _
        $region16: #{_forward_train.1} parent=11 // pred_fallthru
          _
        // Predicated region
        $region17: #{_forward_train.1} parent=11 // pred_check
          %p250 = pneg %p112
        $region18: #{_forward_train.1} parent=11 // pred_check_branch
          %252 = sbr.rel (%p250) target = $region20
        $region19: #{_forward_train.1} parent=11 // pred_region
          _
        $region20: #{_forward_train.1} parent=11 // pred_fallthru
          _
        // Predicated region
        $region21: #{_forward_train.1} parent=11 // pred_check
          %p253 = pneg %p133
        $region22: #{_forward_train.1} parent=11 // pred_check_branch
          %255 = sbr.rel (%p253) target = $region24
        $region23: #{_forward_train.1} parent=11 // pred_region
          _
        $region24: #{_forward_train.1} parent=11 // pred_fallthru
          _
        // Predicated region
        $region25: #{_forward_train.1} parent=11 // pred_check
          %p256 = pneg %p154
        $region26: #{_forward_train.1} parent=11 // pred_check_branch
          %258 = sbr.rel (%p256) target = $region28
        $region27: #{_forward_train.1} parent=11 // pred_region
          _
        $region28: #{_forward_train.1} parent=11 // pred_fallthru
          _
      $region12: #{_forward_train.1} parent=5 // pred_fallthru
        _
      %p259 = scmp.lt.s32.totalorder %s18, 2
      // Predicated region
      $region29: #{_forward_train.1} parent=5 // pred_check
        %p260 = pneg %p259
      $region30: #{_forward_train.1} parent=5 // pred_check_branch
        %262 = sbr.rel (%p260) target = $region32
      $region31: #{_forward_train.1} parent=5 // pred_region
        // Predicated region
        $region33: #{_forward_train.1} parent=31 // pred_check
          %p263 = pneg %p38
        $region34: #{_forward_train.1} parent=31 // pred_check_branch
          %265 = sbr.rel (%p263) target = $region36
        $region35: #{_forward_train.1} parent=31 // pred_region
          %s266 = smul.u32 16, %s18
          %p267 = scmp.lt.s32.totalorder %s266, 31
          %s268 = scalar_select %p267, %s266, 31
          %s269 = smul.addr %s268, 4
          %s270 = scalar_lea.vmem %s0, %s269
          %s271 = smul.u32 16, %s18
        $region36: #{_forward_train.1} parent=31 // pred_fallthru
          _
        // Predicated region
        $region37: #{_forward_train.1} parent=31 // pred_check
          %p272 = pneg %p64
        $region38: #{_forward_train.1} parent=31 // pred_check_branch
          %274 = sbr.rel (%p272) target = $region40
        $region39: #{_forward_train.1} parent=31 // pred_region
          %s275 = smul.u32 16, %s18
          %p276 = scmp.lt.s32.totalorder %s275, 31
          %s277 = scalar_select %p276, %s275, 31
          %s278 = smul.addr %s277, 8
          %s279 = scalar_lea.vmem %s1, %s278
          %s280 = smul.u32 16, %s18
        $region40: #{_forward_train.1} parent=31 // pred_fallthru
          _
      $region32: #{_forward_train.1} parent=5 // pred_fallthru
        _
      %p281 = scmp.le.s32.totalorder 1, %s18
      %p282 = scmp.lt.s32.totalorder %s18, 3
      %p283 = pnand %p281, %p282
      %p284 = pneg %p283
      // Predicated region
      $region41: #{_forward_train.1} parent=5 // pred_check
        _
      $region42: #{_forward_train.1} parent=5 // pred_check_branch
        %286 = sbr.rel (%p283) target = $region44
      $region43: #{_forward_train.1} parent=5 // pred_region
        %s287 = ssub.s32 %s18, 1
        %s288 = smul.u32 16, %s23
        %p289 = scmp.lt.s32.totalorder %s288, 31
        %s290 = scalar_select %p289, %s288, 31
        %s291 = smul.addr %s290, 4
        %s292 = scalar_lea.vmem %s0, %s291
        %p293 = pneg %p44
        %p294 = pneg %p41
        %s295 = smul.u32 16, %s23
        %p296 = scmp.lt.s32.totalorder %s295, 31
        %s297 = scalar_select %p296, %s295, 31
        %s298 = smul.addr %s297, 8
        %s299 = scalar_lea.vmem %s1, %s298
        %p300 = pneg %p70
        %p301 = pneg %p67
        %p302 = pneg %p91
        %p303 = pneg %p88
        %p304 = pneg %p112
        %p305 = pneg %p109
        %p306 = pneg %p133
        %p307 = pneg %p130
        %p308 = pneg %p154
        %p309 = pneg %p151
        %p310 = pneg %p180
        %p311 = pneg %p177
        %s312 = sand.u32 %s167, 1
        %s313 = scalar_lea.sflag [#allocation3], %s312
        %s314 = sand.u32 %s167, 1
        %s315 = smul.addr %s314, 64
        %s316 = scalar_lea.vmem [#allocation2], %s315
        %p317 = pneg %p206
        %p318 = pneg %p203
        %s319 = smul.u32 16, %s23
        %p320 = scmp.lt.s32.totalorder %s319, 31
        %s321 = scalar_select %p320, %s319, 31
        %s322 = smul.addr %s321, 8
        %s323 = scalar_lea.vmem %s7, %s322
        %p324 = pneg %p232
        %p325 = pneg %p229
        %s326 = smul.u32 16, %s23
        %p327 = scmp.lt.s32.totalorder %s326, 31
        %s328 = scalar_select %p327, %s326, 31
        %s329 = smul.addr %s328, 8
        %s330 = scalar_lea.vmem %s8, %s329
        %s331 = smul.u32 16, %s23
        %p332 = scmp.lt.s32.totalorder %s331, 31
        %s333 = scalar_select %p332, %s331, 31
        %s334 = smul.addr %s333, 4
        %s335 = scalar_lea.vmem %s0, %s334
        %s336 = smul.u32 16, %s23
        %s337 = smul.u32 16, %s23
        %p338 = scmp.lt.s32.totalorder %s337, 31
        %s339 = scalar_select %p338, %s337, 31
        %s340 = smul.addr %s339, 8
        %s341 = scalar_lea.vmem %s1, %s340
        %s342 = smul.u32 16, %s23
        %s343 = smul.u32 16, %s23
        %s344 = smul.u32 16, %s23
        %p345 = scmp.lt.s32.totalorder %s344, 31
        %s346 = scalar_select %p345, %s344, 31
        %s347 = smul.addr %s346, 8
        %s348 = scalar_lea.vmem %s7, %s347
        %s349 = smul.u32 16, %s23
        %s350 = smul.u32 16, %s23
        %p351 = scmp.lt.s32.totalorder %s350, 31
        %s352 = scalar_select %p351, %s350, 31
        %s353 = smul.addr %s352, 8
        %s354 = scalar_lea.vmem %s8, %s353
        %s355 = smul.u32 16, %s23
        %v357 = vld [vmem:[%s335] sm:$0xf]
        %v358 = vld [vmem:[%s335 + $0x4] sm:$0xf]
        %v359 = vld [vmem:[%s335 + $0x8] sm:$0xf]
        %v360 = vld [vmem:[%s335 + $0xc] sm:$0xf]
        %v361 = vld [vmem:[%s335 + $0x10] sm:$0xf]
        %v362 = vld [vmem:[%s335 + $0x14] sm:$0xf]
        %v363 = vld [vmem:[%s335 + $0x18] sm:$0xf]
        %v364 = vld [vmem:[%s335 + $0x1c] sm:$0xf]
        %v365 = vld [vmem:[%s335 + $0x20] sm:$0xf]
        %v366 = vld [vmem:[%s335 + $0x24] sm:$0xf]
        %v367 = vld [vmem:[%s335 + $0x28] sm:$0xf]
        %v368 = vld [vmem:[%s335 + $0x2c] sm:$0xf]
        %v369 = vld [vmem:[%s335 + $0x30] sm:$0xf]
        %v370 = vld [vmem:[%s335 + $0x34] sm:$0xf]
        %v371 = vld [vmem:[%s335 + $0x38] sm:$0xf]
        %v372 = vld [vmem:[%s335 + $0x3c] sm:$0xf]
        %v373 = vld [vmem:[%s2] sm:$0xf]
        %v374 = vld [vmem:[%s2 + $0x4] sm:$0xf]
        %v375 = vld [vmem:[%s2 + $0x8] sm:$0xf]
        %v376 = vld [vmem:[%s2 + $0xc] sm:$0xf]
        %v377 = vld [vmem:[%s3] sm:$0x1]
        %v379 = vlaneseq
        %v380 = vshrl.u32 %v379, 7
        %v381 = vsub.s32 0, %v380
        %v382 = vrot.slane %v377, %v381
        %v400 = vunpack.c.l.b16 %v357
        %v401 = vunpack.c.l.b16 %v358
        %v402 = vunpack.c.l.b16 %v359
        %v403 = vunpack.c.l.b16 %v360
        %v404 = vunpack.c.l.b16 %v361
        %v405 = vunpack.c.l.b16 %v362
        %v406 = vunpack.c.l.b16 %v363
        %v407 = vunpack.c.l.b16 %v364
        %v408 = vunpack.c.l.b16 %v365
        %v409 = vunpack.c.l.b16 %v366
        %v410 = vunpack.c.l.b16 %v367
        %v411 = vunpack.c.l.b16 %v368
        %v412 = vunpack.c.l.b16 %v369
        %v413 = vunpack.c.l.b16 %v370
        %v414 = vunpack.c.l.b16 %v371
        %v415 = vunpack.c.l.b16 %v372
        %v416 = vpack.c.b16 %v401, %v400
        %v417 = vpack.c.b16 %v403, %v402
        %v418 = vpack.c.b16 %v405, %v404
        %v419 = vpack.c.b16 %v407, %v406
        %v420 = vpack.c.b16 %v409, %v408
        %v421 = vpack.c.b16 %v411, %v410
        %v422 = vpack.c.b16 %v413, %v412
        %v423 = vpack.c.b16 %v415, %v414
        %v428 = vunpack.c.l.b16 %v373
        %v429 = vunpack.c.l.b16 %v374
        %v430 = vunpack.c.l.b16 %v375
        %v431 = vunpack.c.l.b16 %v376
        %v432 = vpack.c.b16 %v429, %v428
        %v433 = vpack.c.b16 %v431, %v430
        %vm436 = vcmask 261120
        %v438 = vsel %vm436, %v416, 0
        %v441 = vsel %vm436, %v417, 0
        %v444 = vsel %vm436, %v418, 0
        %v447 = vsel %vm436, %v419, 0
        %v450 = vsel %vm436, %v420, 0
        %v453 = vsel %vm436, %v421, 0
        %v456 = vsel %vm436, %v422, 0
        %v459 = vsel %vm436, %v423, 0
        %461 = vmatprep.subr.bf16.mxu0 0
        %462 = vmatpush1.bf16.msra.mxu0 %v432
        %463 = vmatprep.subr.bf16.mxu0 0
        %464 = vmatpush1.bf16.msra.mxu0 %v433
        %465 = vmatprep.subr.bf16.mxu0 0
        %466 = vmatpush1.bf16.msra.mxu0 0
        %467 = vmatprep.subr.bf16.mxu0 0
        %468 = vmatpush1.bf16.msra.mxu0 0
        %469 = vmatprep.subr.bf16.mxu0 0
        %470 = vmatpush1.bf16.msra.mxu0 0
        %471 = vmatprep.subr.bf16.mxu0 0
        %472 = vmatpush1.bf16.msra.mxu0 0
        %473 = vmatprep.subr.bf16.mxu0 0
        %474 = vmatpush1.bf16.msra.mxu0 0
        %475 = vmatprep.subr.bf16.mxu0 0
        %476 = vmatpush1.bf16.msra.mxu0 0
        %477 = vmatprep.subr.bf16.mxu0 0
        %478 = vmatpush1.bf16.msra.mxu0 0
        %479 = vmatprep.subr.bf16.mxu0 0
        %480 = vmatpush1.bf16.msra.mxu0 0
        %481 = vmatprep.subr.bf16.mxu0 0
        %482 = vmatpush1.bf16.msra.mxu0 0
        %483 = vmatprep.subr.bf16.mxu0 0
        %484 = vmatpush1.bf16.msra.mxu0 0
        %485 = vmatprep.subr.bf16.mxu0 0
        %486 = vmatpush1.bf16.msra.mxu0 0
        %487 = vmatprep.subr.bf16.mxu0 0
        %488 = vmatpush1.bf16.msra.mxu0 0
        %489 = vmatprep.subr.bf16.mxu0 0
        %490 = vmatpush1.bf16.msra.mxu0 0
        %491 = vmatprep.subr.bf16.mxu0 0
        %492 = vmatpush1.bf16.msra.mxu0 0
        %493 = vmatprep.mubr.bf16.mxu0 0
        %494 = vmatmul.mubr.bf16.gmra.mrb[0].mxu0 %v438
        %v495 = vpop.f32.mrb[0].mxu0
        %v496 = vadd.f32 %v382, %v495
        %v497 = vpop.f32.mrb[0].mxu0
        %v498 = vpop.f32.mrb[0].mxu0
        %v499 = vadd.f32 %v382, %v498
        %v500 = vpop.f32.mrb[0].mxu0
        %501 = vmatprep.mubr.bf16.mxu0 0
        %502 = vmatmul.mubr.bf16.gmra.mrb[0].mxu0 %v441
        %v503 = vpop.f32.mrb[0].mxu0
        %v504 = vadd.f32 %v382, %v503
        %v505 = vpop.f32.mrb[0].mxu0
        %v506 = vpop.f32.mrb[0].mxu0
        %v507 = vadd.f32 %v382, %v506
        %v508 = vpop.f32.mrb[0].mxu0
        %509 = vmatprep.mubr.bf16.mxu0 0
        %510 = vmatmul.mubr.bf16.gmra.mrb[0].mxu0 %v444
        %v511 = vpop.f32.mrb[0].mxu0
        %v512 = vadd.f32 %v382, %v511
        %v513 = vpop.f32.mrb[0].mxu0
        %v514 = vpop.f32.mrb[0].mxu0
        %v515 = vadd.f32 %v382, %v514
        %v516 = vpop.f32.mrb[0].mxu0
        %517 = vmatprep.mubr.bf16.mxu0 0
        %518 = vmatmul.mubr.bf16.gmra.mrb[0].mxu0 %v447
        %v519 = vpop.f32.mrb[0].mxu0
        %v520 = vadd.f32 %v382, %v519
        %v521 = vpop.f32.mrb[0].mxu0
        %v522 = vpop.f32.mrb[0].mxu0
        %v523 = vadd.f32 %v382, %v522
        %v524 = vpop.f32.mrb[0].mxu0
        %525 = vmatprep.mubr.bf16.mxu0 0
        %526 = vmatmul.mubr.bf16.gmra.mrb[0].mxu0 %v450
        %v527 = vpop.f32.mrb[0].mxu0
        %v528 = vadd.f32 %v382, %v527
        %v529 = vpop.f32.mrb[0].mxu0
        %v530 = vpop.f32.mrb[0].mxu0
        %v531 = vadd.f32 %v382, %v530
        %v532 = vpop.f32.mrb[0].mxu0
        %533 = vmatprep.mubr.bf16.mxu0 0
        %534 = vmatmul.mubr.bf16.gmra.mrb[0].mxu0 %v453
        %v535 = vpop.f32.mrb[0].mxu0
        %v536 = vadd.f32 %v382, %v535
        %v537 = vpop.f32.mrb[0].mxu0
        %v538 = vpop.f32.mrb[0].mxu0
        %v539 = vadd.f32 %v382, %v538
        %v540 = vpop.f32.mrb[0].mxu0
        %541 = vmatprep.mubr.bf16.mxu0 0
        %542 = vmatmul.mubr.bf16.gmra.mrb[0].mxu0 %v456
        %v543 = vpop.f32.mrb[0].mxu0
        %v544 = vadd.f32 %v382, %v543
        %v545 = vpop.f32.mrb[0].mxu0
        %v546 = vpop.f32.mrb[0].mxu0
        %v547 = vadd.f32 %v382, %v546
        %v548 = vpop.f32.mrb[0].mxu0
        %549 = vmatprep.mubr.bf16.mxu0 0
        %550 = vmatmul.mubr.bf16.gmra.mrb[0].mxu0 %v459
        %v551 = vpop.f32.mrb[0].mxu0
        %v552 = vadd.f32 %v382, %v551
        %v553 = vpop.f32.mrb[0].mxu0
        %v554 = vpop.f32.mrb[0].mxu0
        %v555 = vadd.f32 %v382, %v554
        %v556 = vpop.f32.mrb[0].mxu0
        %557 = vdwg.mxu0
        %v558 = vmax.f32 %v496, 0.0
        %v559 = vmax.f32 %v499, 0.0
        %v560 = vmax.f32 %v504, 0.0
        %v561 = vmax.f32 %v507, 0.0
        %v562 = vmax.f32 %v512, 0.0
        %v563 = vmax.f32 %v515, 0.0
        %v564 = vmax.f32 %v520, 0.0
        %v565 = vmax.f32 %v523, 0.0
        %v566 = vmax.f32 %v528, 0.0
        %v567 = vmax.f32 %v531, 0.0
        %v568 = vmax.f32 %v536, 0.0
        %v569 = vmax.f32 %v539, 0.0
        %v570 = vmax.f32 %v544, 0.0
        %v571 = vmax.f32 %v547, 0.0
        %v572 = vmax.f32 %v552, 0.0
        %v573 = vmax.f32 %v555, 0.0
        %v574 = vpack.c.bf16 %v559, %v558
        %v575 = vpack.c.bf16 %v561, %v560
        %v576 = vpack.c.bf16 %v563, %v562
        %v577 = vpack.c.bf16 %v565, %v564
        %v578 = vpack.c.bf16 %v567, %v566
        %v579 = vpack.c.bf16 %v569, %v568
        %v580 = vpack.c.bf16 %v571, %v570
        %v581 = vpack.c.bf16 %v573, %v572
        %v582 = vld [vmem:[%s4] sm:$0xf]
        %v583 = vld [vmem:[%s4 + $0x4] sm:$0xf]
        %v584 = vld [vmem:[%s4 + $0x8] sm:$0xf]
        %v585 = vld [vmem:[%s4 + $0xc] sm:$0xf]
        %v586 = vld [vmem:[%s4 + $0x10] sm:$0xf]
        %v587 = vld [vmem:[%s4 + $0x14] sm:$0xf]
        %v588 = vld [vmem:[%s4 + $0x18] sm:$0xf]
        %v589 = vld [vmem:[%s4 + $0x1c] sm:$0xf]
        %v590 = vld [vmem:[%s4 + $0x20] sm:$0xf]
        %v591 = vld [vmem:[%s4 + $0x24] sm:$0xf]
        %v592 = vld [vmem:[%s4 + $0x28] sm:$0xf]
        %v593 = vld [vmem:[%s4 + $0x2c] sm:$0xf]
        %v594 = vld [vmem:[%s4 + $0x30] sm:$0xf]
        %v595 = vld [vmem:[%s4 + $0x34] sm:$0xf]
        %v596 = vld [vmem:[%s4 + $0x38] sm:$0xf]
        %v597 = vld [vmem:[%s4 + $0x3c] sm:$0xf]
        %v598 = vld [vmem:[%s5] sm:$0x1]
        %v600 = vlaneseq
        %v601 = vshrl.u32 %v600, 7
        %v602 = vsub.s32 0, %v601
        %v603 = vrot.slane %v598, %v602
        %v621 = vunpack.c.l.b16 %v582
        %v622 = vunpack.c.l.b16 %v583
        %v623 = vunpack.c.l.b16 %v584
        %v624 = vunpack.c.l.b16 %v585
        %v625 = vunpack.c.l.b16 %v586
        %v626 = vunpack.c.l.b16 %v587
        %v627 = vunpack.c.l.b16 %v588
        %v628 = vunpack.c.l.b16 %v589
        %v629 = vunpack.c.l.b16 %v590
        %v630 = vunpack.c.l.b16 %v591
        %v631 = vunpack.c.l.b16 %v592
        %v632 = vunpack.c.l.b16 %v593
        %v633 = vunpack.c.l.b16 %v594
        %v634 = vunpack.c.l.b16 %v595
        %v635 = vunpack.c.l.b16 %v596
        %v636 = vunpack.c.l.b16 %v597
        %v637 = vpack.c.b16 %v622, %v621
        %v638 = vpack.c.b16 %v624, %v623
        %v639 = vpack.c.b16 %v626, %v625
        %v640 = vpack.c.b16 %v628, %v627
        %v641 = vpack.c.b16 %v630, %v629
        %v642 = vpack.c.b16 %v632, %v631
        %v643 = vpack.c.b16 %v634, %v633
        %v644 = vpack.c.b16 %v636, %v635
        %653 = vmatprep.subr.bf16.mxu0 0
        %654 = vmatpush1.bf16.msra.mxu0 %v637
        %655 = vmatprep.subr.bf16.mxu0 0
        %656 = vmatpush1.bf16.msra.mxu0 %v638
        %657 = vmatprep.subr.bf16.mxu0 0
        %658 = vmatpush1.bf16.msra.mxu0 %v639
        %659 = vmatprep.subr.bf16.mxu0 0
        %660 = vmatpush1.bf16.msra.mxu0 %v640
        %661 = vmatprep.subr.bf16.mxu0 0
        %662 = vmatpush1.bf16.msra.mxu0 %v641
        %663 = vmatprep.subr.bf16.mxu0 0
        %664 = vmatpush1.bf16.msra.mxu0 %v642
        %665 = vmatprep.subr.bf16.mxu0 0
        %666 = vmatpush1.bf16.msra.mxu0 %v643
        %667 = vmatprep.subr.bf16.mxu0 0
        %668 = vmatpush1.bf16.msra.mxu0 %v644
        %669 = vmatprep.subr.bf16.mxu0 0
        %670 = vmatpush1.bf16.msra.mxu0 0
        %671 = vmatprep.subr.bf16.mxu0 0
        %672 = vmatpush1.bf16.msra.mxu0 0
        %673 = vmatprep.subr.bf16.mxu0 0
        %674 = vmatpush1.bf16.msra.mxu0 0
        %675 = vmatprep.subr.bf16.mxu0 0
        %676 = vmatpush1.bf16.msra.mxu0 0
        %677 = vmatprep.subr.bf16.mxu0 0
        %678 = vmatpush1.bf16.msra.mxu0 0
        %679 = vmatprep.subr.bf16.mxu0 0
        %680 = vmatpush1.bf16.msra.mxu0 0
        %681 = vmatprep.subr.bf16.mxu0 0
        %682 = vmatpush1.bf16.msra.mxu0 0
        %683 = vmatprep.subr.bf16.mxu0 0
        %684 = vmatpush1.bf16.msra.mxu0 0
        %685 = vmatprep.mubr.bf16.mxu0 0
        %686 = vmatmul.mubr.bf16.gmra.mrb[0].mxu0 %v574
        %v687 = vpop.f32.mrb[0].mxu0
        %v688 = vadd.f32 %v603, %v687
        %v689 = vpop.f32.mrb[0].mxu0
        %v690 = vpop.f32.mrb[0].mxu0
        %v691 = vadd.f32 %v603, %v690
        %v692 = vpop.f32.mrb[0].mxu0
        %693 = vmatprep.mubr.bf16.mxu0 0
        %694 = vmatmul.mubr.bf16.gmra.mrb[0].mxu0 %v575
        %v695 = vpop.f32.mrb[0].mxu0
        %v696 = vadd.f32 %v603, %v695
        %v697 = vpop.f32.mrb[0].mxu0
        %v698 = vpop.f32.mrb[0].mxu0
        %v699 = vadd.f32 %v603, %v698
        %v700 = vpop.f32.mrb[0].mxu0
        %701 = vmatprep.mubr.bf16.mxu0 0
        %702 = vmatmul.mubr.bf16.gmra.mrb[0].mxu0 %v576
        %v703 = vpop.f32.mrb[0].mxu0
        %v704 = vadd.f32 %v603, %v703
        %v705 = vpop.f32.mrb[0].mxu0
        %v706 = vpop.f32.mrb[0].mxu0
        %v707 = vadd.f32 %v603, %v706
        %v708 = vpop.f32.mrb[0].mxu0
        %709 = vmatprep.mubr.bf16.mxu0 0
        %710 = vmatmul.mubr.bf16.gmra.mrb[0].mxu0 %v577
        %v711 = vpop.f32.mrb[0].mxu0
        %v712 = vadd.f32 %v603, %v711
        %v713 = vpop.f32.mrb[0].mxu0
        %v714 = vpop.f32.mrb[0].mxu0
        %v715 = vadd.f32 %v603, %v714
        %v716 = vpop.f32.mrb[0].mxu0
        %717 = vmatprep.mubr.bf16.mxu0 0
        %718 = vmatmul.mubr.bf16.gmra.mrb[0].mxu0 %v578
        %v719 = vpop.f32.mrb[0].mxu0
        %v720 = vadd.f32 %v603, %v719
        %v721 = vpop.f32.mrb[0].mxu0
        %v722 = vpop.f32.mrb[0].mxu0
        %v723 = vadd.f32 %v603, %v722
        %v724 = vpop.f32.mrb[0].mxu0
        %725 = vmatprep.mubr.bf16.mxu0 0
        %726 = vmatmul.mubr.bf16.gmra.mrb[0].mxu0 %v579
        %v727 = vpop.f32.mrb[0].mxu0
        %v728 = vadd.f32 %v603, %v727
        %v729 = vpop.f32.mrb[0].mxu0
        %v730 = vpop.f32.mrb[0].mxu0
        %v731 = vadd.f32 %v603, %v730
        %v732 = vpop.f32.mrb[0].mxu0
        %733 = vmatprep.mubr.bf16.mxu0 0
        %734 = vmatmul.mubr.bf16.gmra.mrb[0].mxu0 %v580
        %v735 = vpop.f32.mrb[0].mxu0
        %v736 = vadd.f32 %v603, %v735
        %v737 = vpop.f32.mrb[0].mxu0
        %v738 = vpop.f32.mrb[0].mxu0
        %v739 = vadd.f32 %v603, %v738
        %v740 = vpop.f32.mrb[0].mxu0
        %741 = vmatprep.mubr.bf16.mxu0 0
        %742 = vmatmul.mubr.bf16.gmra.mrb[0].mxu0 %v581
        %v743 = vpop.f32.mrb[0].mxu0
        %v744 = vadd.f32 %v603, %v743
        %v745 = vpop.f32.mrb[0].mxu0
        %v746 = vpop.f32.mrb[0].mxu0
        %v747 = vadd.f32 %v603, %v746
        %v748 = vpop.f32.mrb[0].mxu0
        %749 = vdwg.mxu0
        %750 = vmax.xlane.f32.xlu0 %v688
        %v751 = vpop.xlane.xlu0 %750
        %752 = vmax.xlane.f32.xlu0 %v691
        %v753 = vpop.xlane.xlu0 %752
        %754 = vmax.xlane.f32.xlu0 %v696
        %v755 = vpop.xlane.xlu0 %754
        %756 = vmax.xlane.f32.xlu0 %v699
        %v757 = vpop.xlane.xlu0 %756
        %758 = vmax.xlane.f32.xlu0 %v704
        %v759 = vpop.xlane.xlu0 %758
        %760 = vmax.xlane.f32.xlu0 %v707
        %v761 = vpop.xlane.xlu0 %760
        %762 = vmax.xlane.f32.xlu0 %v712
        %v763 = vpop.xlane.xlu0 %762
        %764 = vmax.xlane.f32.xlu0 %v715
        %v765 = vpop.xlane.xlu0 %764
        %766 = vmax.xlane.f32.xlu0 %v720
        %v767 = vpop.xlane.xlu0 %766
        %768 = vmax.xlane.f32.xlu0 %v723
        %v769 = vpop.xlane.xlu0 %768
        %770 = vmax.xlane.f32.xlu0 %v728
        %v771 = vpop.xlane.xlu0 %770
        %772 = vmax.xlane.f32.xlu0 %v731
        %v773 = vpop.xlane.xlu0 %772
        %774 = vmax.xlane.f32.xlu0 %v736
        %v775 = vpop.xlane.xlu0 %774
        %776 = vmax.xlane.f32.xlu0 %v739
        %v777 = vpop.xlane.xlu0 %776
        %778 = vmax.xlane.f32.xlu0 %v744
        %v779 = vpop.xlane.xlu0 %778
        %780 = vmax.xlane.f32.xlu0 %v747
        %v781 = vpop.xlane.xlu0 %780
        %v782 = vsub.f32 %v688, %v751
        %v783 = vsub.f32 %v691, %v753
        %v784 = vsub.f32 %v696, %v755
        %v785 = vsub.f32 %v699, %v757
        %v786 = vsub.f32 %v704, %v759
        %v787 = vsub.f32 %v707, %v761
        %v788 = vsub.f32 %v712, %v763
        %v789 = vsub.f32 %v715, %v765
        %v790 = vsub.f32 %v720, %v767
        %v791 = vsub.f32 %v723, %v769
        %v792 = vsub.f32 %v728, %v771
        %v793 = vsub.f32 %v731, %v773
        %v794 = vsub.f32 %v736, %v775
        %v795 = vsub.f32 %v739, %v777
        %v796 = vsub.f32 %v744, %v779
        %v797 = vsub.f32 %v747, %v781
        %v798 = vmul.f32 %v782, 1.442695
        %v799 = vpow.pop %v798
        %v800 = vmul.f32 %v783, 1.442695
        %v801 = vpow.pop %v800
        %v802 = vmul.f32 %v784, 1.442695
        %v803 = vpow.pop %v802
        %v804 = vmul.f32 %v785, 1.442695
        %v805 = vpow.pop %v804
        %v806 = vmul.f32 %v786, 1.442695
        %v807 = vpow.pop %v806
        %v808 = vmul.f32 %v787, 1.442695
        %v809 = vpow.pop %v808
        %v810 = vmul.f32 %v788, 1.442695
        %v811 = vpow.pop %v810
        %v812 = vmul.f32 %v789, 1.442695
        %v813 = vpow.pop %v812
        %v814 = vmul.f32 %v790, 1.442695
        %v815 = vpow.pop %v814
        %v816 = vmul.f32 %v791, 1.442695
        %v817 = vpow.pop %v816
        %v818 = vmul.f32 %v792, 1.442695
        %v819 = vpow.pop %v818
        %v820 = vmul.f32 %v793, 1.442695
        %v821 = vpow.pop %v820
        %v822 = vmul.f32 %v794, 1.442695
        %v823 = vpow.pop %v822
        %v824 = vmul.f32 %v795, 1.442695
        %v825 = vpow.pop %v824
        %v826 = vmul.f32 %v796, 1.442695
        %v827 = vpow.pop %v826
        %v828 = vmul.f32 %v797, 1.442695
        %v829 = vpow.pop %v828
        %830 = vadd.xlane.f32.xlu0 %v799
        %v831 = vpop.xlane.xlu0 %830
        %832 = vadd.xlane.f32.xlu0 %v801
        %v833 = vpop.xlane.xlu0 %832
        %834 = vadd.xlane.f32.xlu0 %v803
        %v835 = vpop.xlane.xlu0 %834
        %836 = vadd.xlane.f32.xlu0 %v805
        %v837 = vpop.xlane.xlu0 %836
        %838 = vadd.xlane.f32.xlu0 %v807
        %v839 = vpop.xlane.xlu0 %838
        %840 = vadd.xlane.f32.xlu0 %v809
        %v841 = vpop.xlane.xlu0 %840
        %842 = vadd.xlane.f32.xlu0 %v811
        %v843 = vpop.xlane.xlu0 %842
        %844 = vadd.xlane.f32.xlu0 %v813
        %v845 = vpop.xlane.xlu0 %844
        %846 = vadd.xlane.f32.xlu0 %v815
        %v847 = vpop.xlane.xlu0 %846
        %848 = vadd.xlane.f32.xlu0 %v817
        %v849 = vpop.xlane.xlu0 %848
        %850 = vadd.xlane.f32.xlu0 %v819
        %v851 = vpop.xlane.xlu0 %850
        %852 = vadd.xlane.f32.xlu0 %v821
        %v853 = vpop.xlane.xlu0 %852
        %854 = vadd.xlane.f32.xlu0 %v823
        %v855 = vpop.xlane.xlu0 %854
        %856 = vadd.xlane.f32.xlu0 %v825
        %v857 = vpop.xlane.xlu0 %856
        %858 = vadd.xlane.f32.xlu0 %v827
        %v859 = vpop.xlane.xlu0 %858
        %860 = vadd.xlane.f32.xlu0 %v829
        %v861 = vpop.xlane.xlu0 %860
        %v862 = vrcp.pop %v831
        %v863 = vrcp.pop %v833
        %v864 = vrcp.pop %v835
        %v865 = vrcp.pop %v837
        %v866 = vrcp.pop %v839
        %v867 = vrcp.pop %v841
        %v868 = vrcp.pop %v843
        %v869 = vrcp.pop %v845
        %v870 = vrcp.pop %v847
        %v871 = vrcp.pop %v849
        %v872 = vrcp.pop %v851
        %v873 = vrcp.pop %v853
        %v874 = vrcp.pop %v855
        %v875 = vrcp.pop %v857
        %v876 = vrcp.pop %v859
        %v877 = vrcp.pop %v861
        %v878 = vmul.f32 %v799, %v862
        %v879 = vmul.f32 %v801, %v863
        %v880 = vmul.f32 %v803, %v864
        %v881 = vmul.f32 %v805, %v865
        %v882 = vmul.f32 %v807, %v866
        %v883 = vmul.f32 %v809, %v867
        %v884 = vmul.f32 %v811, %v868
        %v885 = vmul.f32 %v813, %v869
        %v886 = vmul.f32 %v815, %v870
        %v887 = vmul.f32 %v817, %v871
        %v888 = vmul.f32 %v819, %v872
        %v889 = vmul.f32 %v821, %v873
        %v890 = vmul.f32 %v823, %v874
        %v891 = vmul.f32 %v825, %v875
        %v892 = vmul.f32 %v827, %v876
        %v893 = vmul.f32 %v829, %v877
        %v894 = vlaneseq
        %v895 = vand.u32 %v894, 127
        %vm896 = vcmp.eq.f32.partialorder %v688, %v751
        %vm897 = vcmp.eq.f32.partialorder %v691, %v753
        %vm898 = vcmp.eq.f32.partialorder %v696, %v755
        %vm899 = vcmp.eq.f32.partialorder %v699, %v757
        %vm900 = vcmp.eq.f32.partialorder %v704, %v759
        %vm901 = vcmp.eq.f32.partialorder %v707, %v761
        %vm902 = vcmp.eq.f32.partialorder %v712, %v763
        %vm903 = vcmp.eq.f32.partialorder %v715, %v765
        %vm904 = vcmp.eq.f32.partialorder %v720, %v767
        %vm905 = vcmp.eq.f32.partialorder %v723, %v769
        %vm906 = vcmp.eq.f32.partialorder %v728, %v771
        %vm907 = vcmp.eq.f32.partialorder %v731, %v773
        %vm908 = vcmp.eq.f32.partialorder %v736, %v775
        %vm909 = vcmp.eq.f32.partialorder %v739, %v777
        %vm910 = vcmp.eq.f32.partialorder %v744, %v779
        %vm911 = vcmp.eq.f32.partialorder %v747, %v781
        %v912 = vcvt.s32.f32 %v895
        %v913 = vsel %vm896, %v912, 128.0
        %v914 = vsel %vm897, %v912, 128.0
        %v915 = vsel %vm898, %v912, 128.0
        %v916 = vsel %vm899, %v912, 128.0
        %v917 = vsel %vm900, %v912, 128.0
        %v918 = vsel %vm901, %v912, 128.0
        %v919 = vsel %vm902, %v912, 128.0
        %v920 = vsel %vm903, %v912, 128.0
        %v921 = vsel %vm904, %v912, 128.0
        %v922 = vsel %vm905, %v912, 128.0
        %v923 = vsel %vm906, %v912, 128.0
        %v924 = vsel %vm907, %v912, 128.0
        %v925 = vsel %vm908, %v912, 128.0
        %v926 = vsel %vm909, %v912, 128.0
        %v927 = vsel %vm910, %v912, 128.0
        %v928 = vsel %vm911, %v912, 128.0
        %929 = vmin.xlane.f32.xlu0 %v913
        %v930 = vpop.xlane.xlu0 %929
        %931 = vmin.xlane.f32.xlu0 %v914
        %v932 = vpop.xlane.xlu0 %931
        %933 = vmin.xlane.f32.xlu0 %v915
        %v934 = vpop.xlane.xlu0 %933
        %935 = vmin.xlane.f32.xlu0 %v916
        %v936 = vpop.xlane.xlu0 %935
        %937 = vmin.xlane.f32.xlu0 %v917
        %v938 = vpop.xlane.xlu0 %937
        %939 = vmin.xlane.f32.xlu0 %v918
        %v940 = vpop.xlane.xlu0 %939
        %941 = vmin.xlane.f32.xlu0 %v919
        %v942 = vpop.xlane.xlu0 %941
        %943 = vmin.xlane.f32.xlu0 %v920
        %v944 = vpop.xlane.xlu0 %943
        %945 = vmin.xlane.f32.xlu0 %v921
        %v946 = vpop.xlane.xlu0 %945
        %947 = vmin.xlane.f32.xlu0 %v922
        %v948 = vpop.xlane.xlu0 %947
        %949 = vmin.xlane.f32.xlu0 %v923
        %v950 = vpop.xlane.xlu0 %949
        %951 = vmin.xlane.f32.xlu0 %v924
        %v952 = vpop.xlane.xlu0 %951
        %953 = vmin.xlane.f32.xlu0 %v925
        %v954 = vpop.xlane.xlu0 %953
        %955 = vmin.xlane.f32.xlu0 %v926
        %v956 = vpop.xlane.xlu0 %955
        %957 = vmin.xlane.f32.xlu0 %v927
        %v958 = vpop.xlane.xlu0 %957
        %959 = vmin.xlane.f32.xlu0 %v928
        %v960 = vpop.xlane.xlu0 %959
        %v961 = vcvt.f32.s32.to.zero.pseudo %v930
        %v962 = vcvt.f32.s32.to.zero.pseudo %v932
        %v963 = vcvt.f32.s32.to.zero.pseudo %v934
        %v964 = vcvt.f32.s32.to.zero.pseudo %v936
        %v965 = vcvt.f32.s32.to.zero.pseudo %v938
        %v966 = vcvt.f32.s32.to.zero.pseudo %v940
        %v967 = vcvt.f32.s32.to.zero.pseudo %v942
        %v968 = vcvt.f32.s32.to.zero.pseudo %v944
        %v969 = vcvt.f32.s32.to.zero.pseudo %v946
        %v970 = vcvt.f32.s32.to.zero.pseudo %v948
        %v971 = vcvt.f32.s32.to.zero.pseudo %v950
        %v972 = vcvt.f32.s32.to.zero.pseudo %v952
        %v973 = vcvt.f32.s32.to.zero.pseudo %v954
        %v974 = vcvt.f32.s32.to.zero.pseudo %v956
        %v975 = vcvt.f32.s32.to.zero.pseudo %v958
        %v976 = vcvt.f32.s32.to.zero.pseudo %v960
        %v977 = vpack.c.bf16 %v879, %v878
        %v978 = vpack.c.bf16 %v881, %v880
        %v979 = vpack.c.bf16 %v883, %v882
        %v980 = vpack.c.bf16 %v885, %v884
        %v981 = vpack.c.bf16 %v887, %v886
        %v982 = vpack.c.bf16 %v889, %v888
        %v983 = vpack.c.bf16 %v891, %v890
        %v984 = vpack.c.bf16 %v893, %v892
        %v993 = vunpack.c.l.b16 %v977
        %v994 = vunpack.c.h.b16 %v977
        %v995 = vunpack.c.l.b16 %v978
        %v996 = vunpack.c.h.b16 %v978
        %v997 = vunpack.c.l.b16 %v979
        %v998 = vunpack.c.h.b16 %v979
        %v999 = vunpack.c.l.b16 %v980
        %v1000 = vunpack.c.h.b16 %v980
        %v1001 = vunpack.c.l.b16 %v981
        %v1002 = vunpack.c.h.b16 %v981
        %v1003 = vunpack.c.l.b16 %v982
        %v1004 = vunpack.c.h.b16 %v982
        %v1005 = vunpack.c.l.b16 %v983
        %v1006 = vunpack.c.h.b16 %v983
        %v1007 = vunpack.c.l.b16 %v984
        %v1008 = vunpack.c.h.b16 %v984
        %v1009 = vpack.c.b16 %v993, %v993
        %v1010 = vpack.c.b16 %v994, %v994
        %v1011 = vpack.c.b16 %v995, %v995
        %v1012 = vpack.c.b16 %v996, %v996
        %v1013 = vpack.c.b16 %v997, %v997
        %v1014 = vpack.c.b16 %v998, %v998
        %v1015 = vpack.c.b16 %v999, %v999
        %v1016 = vpack.c.b16 %v1000, %v1000
        %v1017 = vpack.c.b16 %v1001, %v1001
        %v1018 = vpack.c.b16 %v1002, %v1002
        %v1019 = vpack.c.b16 %v1003, %v1003
        %v1020 = vpack.c.b16 %v1004, %v1004
        %v1021 = vpack.c.b16 %v1005, %v1005
        %v1022 = vpack.c.b16 %v1006, %v1006
        %v1023 = vpack.c.b16 %v1007, %v1007
        %v1024 = vpack.c.b16 %v1008, %v1008
        %1041 = vst [vmem:[%s316] sm:$0xf] %v1009
        %1042 = vst [vmem:[%s316 + $0x4] sm:$0xf] %v1010
        %1043 = vst [vmem:[%s316 + $0x8] sm:$0xf] %v1011
        %1044 = vst [vmem:[%s316 + $0xc] sm:$0xf] %v1012
        %1045 = vst [vmem:[%s316 + $0x10] sm:$0xf] %v1013
        %1046 = vst [vmem:[%s316 + $0x14] sm:$0xf] %v1014
        %1047 = vst [vmem:[%s316 + $0x18] sm:$0xf] %v1015
        %1048 = vst [vmem:[%s316 + $0x1c] sm:$0xf] %v1016
        %1049 = vst [vmem:[%s316 + $0x20] sm:$0xf] %v1017
        %1050 = vst [vmem:[%s316 + $0x24] sm:$0xf] %v1018
        %1051 = vst [vmem:[%s316 + $0x28] sm:$0xf] %v1019
        %1052 = vst [vmem:[%s316 + $0x2c] sm:$0xf] %v1020
        %1053 = vst [vmem:[%s316 + $0x30] sm:$0xf] %v1021
        %1054 = vst [vmem:[%s316 + $0x34] sm:$0xf] %v1022
        %1055 = vst [vmem:[%s316 + $0x38] sm:$0xf] %v1023
        %1056 = vst [vmem:[%s316 + $0x3c] sm:$0xf] %v1024
        %vm1057 = vcmask 7168
        %1058 = vst.msk [vmem:[%s348] sm:$0xff] %vm1057, %v961
        %1059 = vst.msk [vmem:[%s348 + $0x8] sm:$0xff] %vm1057, %v962
        %1060 = vst.msk [vmem:[%s348 + $0x10] sm:$0xff] %vm1057, %v963
        %1061 = vst.msk [vmem:[%s348 + $0x18] sm:$0xff] %vm1057, %v964
        %1062 = vst.msk [vmem:[%s348 + $0x20] sm:$0xff] %vm1057, %v965
        %1063 = vst.msk [vmem:[%s348 + $0x28] sm:$0xff] %vm1057, %v966
        %1064 = vst.msk [vmem:[%s348 + $0x30] sm:$0xff] %vm1057, %v967
        %1065 = vst.msk [vmem:[%s348 + $0x38] sm:$0xff] %vm1057, %v968
        %1066 = vst.msk [vmem:[%s348 + $0x40] sm:$0xff] %vm1057, %v969
        %1067 = vst.msk [vmem:[%s348 + $0x48] sm:$0xff] %vm1057, %v970
        %1068 = vst.msk [vmem:[%s348 + $0x50] sm:$0xff] %vm1057, %v971
        %1069 = vst.msk [vmem:[%s348 + $0x58] sm:$0xff] %vm1057, %v972
        %1070 = vst.msk [vmem:[%s348 + $0x60] sm:$0xff] %vm1057, %v973
        %1071 = vst.msk [vmem:[%s348 + $0x68] sm:$0xff] %vm1057, %v974
        %1072 = vst.msk [vmem:[%s348 + $0x70] sm:$0xff] %vm1057, %v975
        %1073 = vst.msk [vmem:[%s348 + $0x78] sm:$0xff] %vm1057, %v976
        %v1074 = vlog2.pop %v831
        %v1075 = vmul.f32 %v1074, 0.6931472
        %v1076 = vlog2.pop %v833
        %v1077 = vmul.f32 %v1076, 0.6931472
        %v1078 = vlog2.pop %v835
        %v1079 = vmul.f32 %v1078, 0.6931472
        %v1080 = vlog2.pop %v837
        %v1081 = vmul.f32 %v1080, 0.6931472
        %v1082 = vlog2.pop %v839
        %v1083 = vmul.f32 %v1082, 0.6931472
        %v1084 = vlog2.pop %v841
        %v1085 = vmul.f32 %v1084, 0.6931472
        %v1086 = vlog2.pop %v843
        %v1087 = vmul.f32 %v1086, 0.6931472
        %v1088 = vlog2.pop %v845
        %v1089 = vmul.f32 %v1088, 0.6931472
        %v1090 = vlog2.pop %v847
        %v1091 = vmul.f32 %v1090, 0.6931472
        %v1092 = vlog2.pop %v849
        %v1093 = vmul.f32 %v1092, 0.6931472
        %v1094 = vlog2.pop %v851
        %v1095 = vmul.f32 %v1094, 0.6931472
        %v1096 = vlog2.pop %v853
        %v1097 = vmul.f32 %v1096, 0.6931472
        %v1098 = vlog2.pop %v855
        %v1099 = vmul.f32 %v1098, 0.6931472
        %v1100 = vlog2.pop %v857
        %v1101 = vmul.f32 %v1100, 0.6931472
        %v1102 = vlog2.pop %v859
        %v1103 = vmul.f32 %v1102, 0.6931472
        %v1104 = vlog2.pop %v861
        %v1105 = vmul.f32 %v1104, 0.6931472
        %v1106 = vld [vmem:[%s341] sm:$0xff]
        %v1107 = vld [vmem:[%s341 + $0x8] sm:$0xff]
        %v1108 = vld [vmem:[%s341 + $0x10] sm:$0xff]
        %v1109 = vld [vmem:[%s341 + $0x18] sm:$0xff]
        %v1110 = vld [vmem:[%s341 + $0x20] sm:$0xff]
        %v1111 = vld [vmem:[%s341 + $0x28] sm:$0xff]
        %v1112 = vld [vmem:[%s341 + $0x30] sm:$0xff]
        %v1113 = vld [vmem:[%s341 + $0x38] sm:$0xff]
        %v1114 = vld [vmem:[%s341 + $0x40] sm:$0xff]
        %v1115 = vld [vmem:[%s341 + $0x48] sm:$0xff]
        %v1116 = vld [vmem:[%s341 + $0x50] sm:$0xff]
        %v1117 = vld [vmem:[%s341 + $0x58] sm:$0xff]
        %v1118 = vld [vmem:[%s341 + $0x60] sm:$0xff]
        %v1119 = vld [vmem:[%s341 + $0x68] sm:$0xff]
        %v1120 = vld [vmem:[%s341 + $0x70] sm:$0xff]
        %v1121 = vld [vmem:[%s341 + $0x78] sm:$0xff]
        %1122 = vset.pattern.permute.xlu0 0
        %1123 = vperm.xlu0 %1122, %v1106
        %v1124 = vpop.permute.xlu0 %1123
        %1125 = vset.pattern.permute.xlu0 0
        %1126 = vperm.xlu0 %1125, %v1107
        %v1127 = vpop.permute.xlu0 %1126
        %1128 = vset.pattern.permute.xlu0 0
        %1129 = vperm.xlu0 %1128, %v1108
        %v1130 = vpop.permute.xlu0 %1129
        %1131 = vset.pattern.permute.xlu0 0
        %1132 = vperm.xlu0 %1131, %v1109
        %v1133 = vpop.permute.xlu0 %1132
        %1134 = vset.pattern.permute.xlu0 0
        %1135 = vperm.xlu0 %1134, %v1110
        %v1136 = vpop.permute.xlu0 %1135
        %1137 = vset.pattern.permute.xlu0 0
        %1138 = vperm.xlu0 %1137, %v1111
        %v1139 = vpop.permute.xlu0 %1138
        %1140 = vset.pattern.permute.xlu0 0
        %1141 = vperm.xlu0 %1140, %v1112
        %v1142 = vpop.permute.xlu0 %1141
        %1143 = vset.pattern.permute.xlu0 0
        %1144 = vperm.xlu0 %1143, %v1113
        %v1145 = vpop.permute.xlu0 %1144
        %1146 = vset.pattern.permute.xlu0 0
        %1147 = vperm.xlu0 %1146, %v1114
        %v1148 = vpop.permute.xlu0 %1147
        %1149 = vset.pattern.permute.xlu0 0
        %1150 = vperm.xlu0 %1149, %v1115
        %v1151 = vpop.permute.xlu0 %1150
        %1152 = vset.pattern.permute.xlu0 0
        %1153 = vperm.xlu0 %1152, %v1116
        %v1154 = vpop.permute.xlu0 %1153
        %1155 = vset.pattern.permute.xlu0 0
        %1156 = vperm.xlu0 %1155, %v1117
        %v1157 = vpop.permute.xlu0 %1156
        %1158 = vset.pattern.permute.xlu0 0
        %1159 = vperm.xlu0 %1158, %v1118
        %v1160 = vpop.permute.xlu0 %1159
        %1161 = vset.pattern.permute.xlu0 0
        %1162 = vperm.xlu0 %1161, %v1119
        %v1163 = vpop.permute.xlu0 %1162
        %1164 = vset.pattern.permute.xlu0 0
        %1165 = vperm.xlu0 %1164, %v1120
        %v1166 = vpop.permute.xlu0 %1165
        %1167 = vset.pattern.permute.xlu0 0
        %1168 = vperm.xlu0 %1167, %v1121
        %v1169 = vpop.permute.xlu0 %1168
        %vm1170 = vcmp.eq.s32.totalorder %v895, %v1124
        %vm1171 = vcmp.eq.s32.totalorder %v895, %v1127
        %vm1172 = vcmp.eq.s32.totalorder %v895, %v1130
        %vm1173 = vcmp.eq.s32.totalorder %v895, %v1133
        %vm1174 = vcmp.eq.s32.totalorder %v895, %v1136
        %vm1175 = vcmp.eq.s32.totalorder %v895, %v1139
        %vm1176 = vcmp.eq.s32.totalorder %v895, %v1142
        %vm1177 = vcmp.eq.s32.totalorder %v895, %v1145
        %vm1178 = vcmp.eq.s32.totalorder %v895, %v1148
        %vm1179 = vcmp.eq.s32.totalorder %v895, %v1151
        %vm1180 = vcmp.eq.s32.totalorder %v895, %v1154
        %vm1181 = vcmp.eq.s32.totalorder %v895, %v1157
        %vm1182 = vcmp.eq.s32.totalorder %v895, %v1160
        %vm1183 = vcmp.eq.s32.totalorder %v895, %v1163
        %vm1184 = vcmp.eq.s32.totalorder %v895, %v1166
        %vm1185 = vcmp.eq.s32.totalorder %v895, %v1169
        %v1186 = vsub.f32 %v782, %v1075
        %v1187 = vsub.f32 %v783, %v1077
        %v1188 = vsub.f32 %v784, %v1079
        %v1189 = vsub.f32 %v785, %v1081
        %v1190 = vsub.f32 %v786, %v1083
        %v1191 = vsub.f32 %v787, %v1085
        %v1192 = vsub.f32 %v788, %v1087
        %v1193 = vsub.f32 %v789, %v1089
        %v1194 = vsub.f32 %v790, %v1091
        %v1195 = vsub.f32 %v791, %v1093
        %v1196 = vsub.f32 %v792, %v1095
        %v1197 = vsub.f32 %v793, %v1097
        %v1198 = vsub.f32 %v794, %v1099
        %v1199 = vsub.f32 %v795, %v1101
        %v1200 = vsub.f32 %v796, %v1103
        %v1201 = vsub.f32 %v797, %v1105
        %v1202 = vsel %vm1170, %v1186, 0.0
        %v1203 = vsel %vm1171, %v1187, 0.0
        %v1204 = vsel %vm1172, %v1188, 0.0
        %v1205 = vsel %vm1173, %v1189, 0.0
        %v1206 = vsel %vm1174, %v1190, 0.0
        %v1207 = vsel %vm1175, %v1191, 0.0
        %v1208 = vsel %vm1176, %v1192, 0.0
        %v1209 = vsel %vm1177, %v1193, 0.0
        %v1210 = vsel %vm1178, %v1194, 0.0
        %v1211 = vsel %vm1179, %v1195, 0.0
        %v1212 = vsel %vm1180, %v1196, 0.0
        %v1213 = vsel %vm1181, %v1197, 0.0
        %v1214 = vsel %vm1182, %v1198, 0.0
        %v1215 = vsel %vm1183, %v1199, 0.0
        %v1216 = vsel %vm1184, %v1200, 0.0
        %v1217 = vsel %vm1185, %v1201, 0.0
        %1218 = vadd.xlane.f32.xlu0 %v1202
        %v1219 = vpop.xlane.xlu0 %1218
        %1220 = vadd.xlane.f32.xlu0 %v1203
        %v1221 = vpop.xlane.xlu0 %1220
        %1222 = vadd.xlane.f32.xlu0 %v1204
        %v1223 = vpop.xlane.xlu0 %1222
        %1224 = vadd.xlane.f32.xlu0 %v1205
        %v1225 = vpop.xlane.xlu0 %1224
        %1226 = vadd.xlane.f32.xlu0 %v1206
        %v1227 = vpop.xlane.xlu0 %1226
        %1228 = vadd.xlane.f32.xlu0 %v1207
        %v1229 = vpop.xlane.xlu0 %1228
        %1230 = vadd.xlane.f32.xlu0 %v1208
        %v1231 = vpop.xlane.xlu0 %1230
        %1232 = vadd.xlane.f32.xlu0 %v1209
        %v1233 = vpop.xlane.xlu0 %1232
        %1234 = vadd.xlane.f32.xlu0 %v1210
        %v1235 = vpop.xlane.xlu0 %1234
        %1236 = vadd.xlane.f32.xlu0 %v1211
        %v1237 = vpop.xlane.xlu0 %1236
        %1238 = vadd.xlane.f32.xlu0 %v1212
        %v1239 = vpop.xlane.xlu0 %1238
        %1240 = vadd.xlane.f32.xlu0 %v1213
        %v1241 = vpop.xlane.xlu0 %1240
        %1242 = vadd.xlane.f32.xlu0 %v1214
        %v1243 = vpop.xlane.xlu0 %1242
        %1244 = vadd.xlane.f32.xlu0 %v1215
        %v1245 = vpop.xlane.xlu0 %1244
        %1246 = vadd.xlane.f32.xlu0 %v1216
        %v1247 = vpop.xlane.xlu0 %1246
        %1248 = vadd.xlane.f32.xlu0 %v1217
        %v1249 = vpop.xlane.xlu0 %1248
        %v1250 = vsub.f32 0.0, %v1219
        %v1251 = vsub.f32 0.0, %v1221
        %v1252 = vsub.f32 0.0, %v1223
        %v1253 = vsub.f32 0.0, %v1225
        %v1254 = vsub.f32 0.0, %v1227
        %v1255 = vsub.f32 0.0, %v1229
        %v1256 = vsub.f32 0.0, %v1231
        %v1257 = vsub.f32 0.0, %v1233
        %v1258 = vsub.f32 0.0, %v1235
        %v1259 = vsub.f32 0.0, %v1237
        %v1260 = vsub.f32 0.0, %v1239
        %v1261 = vsub.f32 0.0, %v1241
        %v1262 = vsub.f32 0.0, %v1243
        %v1263 = vsub.f32 0.0, %v1245
        %v1264 = vsub.f32 0.0, %v1247
        %v1265 = vsub.f32 0.0, %v1249
        %1266 = vst.msk [vmem:[%s354] sm:$0xff] %vm1057, %v1250
        %1267 = vst.msk [vmem:[%s354 + $0x8] sm:$0xff] %vm1057, %v1251
        %1268 = vst.msk [vmem:[%s354 + $0x10] sm:$0xff] %vm1057, %v1252
        %1269 = vst.msk [vmem:[%s354 + $0x18] sm:$0xff] %vm1057, %v1253
        %1270 = vst.msk [vmem:[%s354 + $0x20] sm:$0xff] %vm1057, %v1254
        %1271 = vst.msk [vmem:[%s354 + $0x28] sm:$0xff] %vm1057, %v1255
        %1272 = vst.msk [vmem:[%s354 + $0x30] sm:$0xff] %vm1057, %v1256
        %1273 = vst.msk [vmem:[%s354 + $0x38] sm:$0xff] %vm1057, %v1257
        %1274 = vst.msk [vmem:[%s354 + $0x40] sm:$0xff] %vm1057, %v1258
        %1275 = vst.msk [vmem:[%s354 + $0x48] sm:$0xff] %vm1057, %v1259
        %1276 = vst.msk [vmem:[%s354 + $0x50] sm:$0xff] %vm1057, %v1260
        %1277 = vst.msk [vmem:[%s354 + $0x58] sm:$0xff] %vm1057, %v1261
        %1278 = vst.msk [vmem:[%s354 + $0x60] sm:$0xff] %vm1057, %v1262
        %1279 = vst.msk [vmem:[%s354 + $0x68] sm:$0xff] %vm1057, %v1263
        %1280 = vst.msk [vmem:[%s354 + $0x70] sm:$0xff] %vm1057, %v1264
        %1281 = vst.msk [vmem:[%s354 + $0x78] sm:$0xff] %vm1057, %v1265
        %s1282 = sand.u32 %s167, 1
        %s1283 = scalar_lea.sflag [#allocation3], %s1282
        %s1284 = sand.u32 %s167, 1
        %s1285 = smul.addr %s1284, 64
        %s1286 = scalar_lea.vmem [#allocation2], %s1285
        %s1287 = smul.u32 16, %s23
        %p1288 = scmp.lt.s32.totalorder %s1287, 31
        %s1289 = scalar_select %p1288, %s1287, 31
        %s1290 = smul.addr %s1289, 8
        %s1291 = scalar_lea.vmem %s7, %s1290
        %s1292 = smul.u32 16, %s23
        %p1293 = scmp.lt.s32.totalorder %s1292, 31
        %s1294 = scalar_select %p1293, %s1292, 31
        %s1295 = smul.addr %s1294, 8
        %s1296 = scalar_lea.vmem %s8, %s1295
        // Predicated region
        $region45: #{_forward_train.1} parent=43 // pred_check
          %p1297 = pneg %p177
        $region46: #{_forward_train.1} parent=43 // pred_check_branch
          %1299 = sbr.rel (%p1297) target = $region48
        $region47: #{_forward_train.1} parent=43 // pred_region
          %s1300 = smul.u32 16, %s23
          %s1302 = ssub.s32 1024, 1024
          %1303 = vsyncadd %s1283, %s1302
          %s1304 = smul.addr %s1300, 64
          %s1305 = scalar_lea.hbm %s6, %s1304
          %s1306 = sshll.u32 %s1286, 4
          %s1307 = int_to_ptr.vmem [resolvable:$true] %s1306
          %1312 = dma.vmem_to_hbm [thread:$0]  %s1307, 1024, %s1305, %s1283, 64, 64, 4
        $region48: #{_forward_train.1} parent=43 // pred_fallthru
          _
        // Predicated region
        $region49: #{_forward_train.1} parent=43 // pred_check
          %p1313 = pneg %p203
        $region50: #{_forward_train.1} parent=43 // pred_check_branch
          %1315 = sbr.rel (%p1313) target = $region52
        $region51: #{_forward_train.1} parent=43 // pred_region
          %s1316 = smul.u32 16, %s23
        $region52: #{_forward_train.1} parent=43 // pred_fallthru
          _
        // Predicated region
        $region53: #{_forward_train.1} parent=43 // pred_check
          %p1317 = pneg %p229
        $region54: #{_forward_train.1} parent=43 // pred_check_branch
          %1319 = sbr.rel (%p1317) target = $region56
        $region55: #{_forward_train.1} parent=43 // pred_region
          %s1320 = smul.u32 16, %s23
        $region56: #{_forward_train.1} parent=43 // pred_fallthru
          _
      $region44: #{_forward_train.1} parent=5 // pred_fallthru
        _
      %p1321 = scmp.le.s32.totalorder 2, %s18
      // Predicated region
      $region57: #{_forward_train.1} parent=5 // pred_check
        %p1322 = pneg %p1321
      $region58: #{_forward_train.1} parent=5 // pred_check_branch
        %1324 = sbr.rel (%p1322) target = $region60
      $region59: #{_forward_train.1} parent=5 // pred_region
        %s1325 = ssub.s32 %s18, 2
        // Predicated region
        $region61: #{_forward_train.1} parent=59 // pred_check
          %p1326 = pneg %p183
        $region62: #{_forward_train.1} parent=59 // pred_check_branch
          %1328 = sbr.rel (%p1326) target = $region64
        $region63: #{_forward_train.1} parent=59 // pred_region
          %s1329 = sand.u32 %s168, 1
          %s1330 = scalar_lea.sflag [#allocation3], %s1329
          %s1331 = sand.u32 %s168, 1
          %s1332 = smul.addr %s1331, 64
          %s1333 = scalar_lea.vmem [#allocation2], %s1332
          %1334 = dma.done %s1330, 1024
        $region64: #{_forward_train.1} parent=59 // pred_fallthru
          _
        // Predicated region
        $region65: #{_forward_train.1} parent=59 // pred_check
          %p1335 = pneg %p209
        $region66: #{_forward_train.1} parent=59 // pred_check_branch
          %1337 = sbr.rel (%p1335) target = $region68
        $region67: #{_forward_train.1} parent=59 // pred_region
          %s1338 = smul.u32 16, %s24
          %p1339 = scmp.lt.s32.totalorder %s1338, 31
          %s1340 = scalar_select %p1339, %s1338, 31
          %s1341 = smul.addr %s1340, 8
          %s1342 = scalar_lea.vmem %s7, %s1341
        $region68: #{_forward_train.1} parent=59 // pred_fallthru
          _
        // Predicated region
        $region69: #{_forward_train.1} parent=59 // pred_check
          %p1343 = pneg %p235
        $region70: #{_forward_train.1} parent=59 // pred_check_branch
          %1345 = sbr.rel (%p1343) target = $region72
        $region71: #{_forward_train.1} parent=59 // pred_region
          %s1346 = smul.u32 16, %s24
          %p1347 = scmp.lt.s32.totalorder %s1346, 31
          %s1348 = scalar_select %p1347, %s1346, 31
          %s1349 = smul.addr %s1348, 8
          %s1350 = scalar_lea.vmem %s8, %s1349
        $region72: #{_forward_train.1} parent=59 // pred_fallthru
          _
      $region60: #{_forward_train.1} parent=5 // pred_fallthru
        _
    $region6: #{_forward_train.1} parent=1 // loop_footer
      %s22 = sadd.s32 1, %s18
    $region7: #{_forward_train.1} parent=1 // loop_footer_branch
      %17 = sbr.rel target = $region3
    $region8: #{_forward_train.1} parent=1 // loop_exit
      _
    %1351 = vsyncpa [#allocation3], 1
    %s1352 = scalar_lea.sflag [#allocation3], 1
    %1353 = vsyncpa %s1352, 1

</llo_original>
